<compile_context>
chip_gen: v5e
topology: v5e:2x2
jax: 0.10.0
libtpu: 0.0.40
codegen_flags: <defaults>
</compile_context>

<pallas_src>
import jax
import jax.numpy as jnp
import numpy as np
from jax import lax
from jax.experimental import pallas as pl
from jax.experimental.pallas import tpu as pltpu


def mha_lstm_kernel(x_ref, len_ref, wf_ref, b_ref, whead_ref,
                    w3_ref, b3_ref, w5_ref, b5_ref,
                    out_ref, outs_scr):
    T, B, _ = x_ref.shape
    NH, H = whead_ref.shape

    # Loop-invariant loads / broadcasts, hoisted once (no per-step re-broadcast).
    w_fused = wf_ref[...]                               # (I+H, 4H)
    bias = jnp.broadcast_to(b_ref[...], (B, 4 * H))     # (B, 4H)
    lens = len_ref[...]                                 # (B, 1) int32
    whead = whead_ref[...]                              # (NH, H)

    # ---- LSTM recurrence (gate order i, f, g, o); h/c live in registers ----
    def step(t, carry):
        h, c = carry
        x_t = x_ref[t]                                  # (B, I)
        zh = jnp.concatenate([x_t, h], axis=1)          # (B, I+H)
        gates = jnp.dot(zh, w_fused,
                        preferred_element_type=jnp.float32) + bias   # one MXU push
        i_g = jax.nn.sigmoid(gates[:, 0 * H:1 * H])
        f_g = jax.nn.sigmoid(gates[:, 1 * H:2 * H])
        g_g = jnp.tanh(gates[:, 2 * H:3 * H])
        o_g = jax.nn.sigmoid(gates[:, 3 * H:4 * H])
        c_new = f_g * c + i_g * g_g
        h_new = o_g * jnp.tanh(c_new)
        valid = t < lens                                # (B, 1) bool
        h_next = jnp.where(valid, h_new, h)             # freeze state past length
        c_next = jnp.where(valid, c_new, c)
        h_out = jnp.where(valid, h_new, 0.0)            # pad_packed zero-pads
        # Store batch-major so attention later reads contiguous (T, H) views.
        for b in range(B):                              # B tiny: static unroll
            outs_scr[b, pl.ds(t, 1), :] = h_out[b:b + 1, :]
        return (h_next, c_next)

    h0 = jnp.zeros((B, H), jnp.float32)
    c0 = jnp.zeros((B, H), jnp.float32)
    h1, _ = lax.fori_loop(0, T, step, (h0, c0), unroll=True)   # T small & static

    # ---- multi-head attention on the MXU (no per-head loop).
    # Softmax runs over ALL T timesteps incl. zero pads, exactly like the
    # unmasked PyTorch reference.
    inv_nh = 1.0 / NH
    rows = []
    for b in range(B):                                  # B tiny: static unroll
        out_b = outs_scr[b]                             # (T, H) leading-axis view
        h1_b = h1[b:b + 1, :]                           # (1, H)
        hw_b = h1_b * whead                             # (NH, H)
        e_b = jnp.dot(out_b, hw_b.T,
                      preferred_element_type=jnp.float32)         # (T, NH) MXU
        s_b = jax.nn.softmax(e_b, axis=0)                          # over T
        m_b = jnp.dot(s_b.T, out_b,
                      preferred_element_type=jnp.float32)          # (NH, H) MXU
        ctx_b = jnp.sum(m_b * whead, axis=0, keepdims=True) * inv_nh   # (1, H)
        rows.append(jnp.concatenate([h1_b, ctx_b], axis=1))        # (1, 2H)
    feat = jnp.concatenate(rows, axis=0)                # (B, 2H)

    # TODO(synk): Dropout(p=0.6) layers (layer2/layer4) applied in eval mode
    # (identity); PyTorch training-mode dropout randomness is not reproduced.
    hid = jnp.dot(feat, w3_ref[...], preferred_element_type=jnp.float32) + b3_ref[...]
    out_ref[...] = (jnp.dot(hid, w5_ref[...], preferred_element_type=jnp.float32)
                    + b5_ref[...])


def multi_head_attention_lstm(x, len_of_oneTr, params):
    """x: (B, T, I) float32; len_of_oneTr: (B,) int (sorted descending)."""
    B, T, _ = x.shape
    H = params["w_heads"].shape[1]
    C = params["w5"].shape[1]
    x_tbi = jnp.transpose(x, (1, 0, 2)).astype(jnp.float32)   # time-major for kernel
    lens = len_of_oneTr.astype(jnp.int32).reshape(B, 1)

    # NOTE: at production sizes, cast MXU operands to bf16 (v6e/v5e) and grid
    # over T chunks / batch tiles; at these tiny shapes f32 keeps exact parity
    # with the PyTorch module and the kernel is latency-bound, not MXU-bound.
    out = pl.pallas_call(
        mha_lstm_kernel,
        out_shape=jax.ShapeDtypeStruct((B, C), jnp.float32),
        in_specs=[pl.BlockSpec(memory_space=pltpu.MemorySpace.VMEM)] * 9,
        out_specs=pl.BlockSpec(memory_space=pltpu.MemorySpace.VMEM),
        scratch_shapes=[
            pltpu.VMEM((B, T, H), jnp.float32),   # LSTM outputs, batch-major
        ],
    )(x_tbi, lens,
      params["w_fused"], params["b_lstm"], params["w_heads"],
      params["w3"], params["b3"], params["w5"], params["b5"])
    # PyTorch forward returns shape (num_layers=1, B, num_classes)
    return out[None, :, :]


def init_params(key, input_size, hidden_size, num_heads, num_classes):
    ks = jax.random.split(key, 8)
    k = 1.0 / np.sqrt(hidden_size)
    w_ih = jax.random.uniform(ks[0], (4 * hidden_size, input_size), jnp.float32, -k, k)
    w_hh = jax.random.uniform(ks[1], (4 * hidden_size, hidden_size), jnp.float32, -k, k)
    b_ih = jax.random.uniform(ks[2], (4 * hidden_size,), jnp.float32, -k, k)
    b_hh = jax.random.uniform(ks[3], (4 * hidden_size,), jnp.float32, -k, k)
    w_heads = jax.random.normal(ks[4], (num_heads, hidden_size), jnp.float32)
    k3 = 1.0 / np.sqrt(2 * hidden_size)
    w3 = jax.random.uniform(ks[5], (hidden_size, 2 * hidden_size), jnp.float32, -k3, k3)
    b3 = jax.random.uniform(ks[6], (hidden_size,), jnp.float32, -k3, k3)
    k5 = 1.0 / np.sqrt(hidden_size)
    w5 = jax.random.uniform(ks[7], (num_classes, hidden_size), jnp.float32, -k5, k5)
    b5 = jnp.zeros((num_classes,), jnp.float32)
    # Fused LSTM weight: gates = [x, h] @ w_fused + bias (gate order i, f, g, o)
    w_fused = jnp.concatenate([w_ih.T, w_hh.T], axis=0)   # (I+H, 4H)
    return dict(
        w_fused=w_fused,
        b_lstm=(b_ih + b_hh).reshape(1, 4 * hidden_size),
        w_heads=w_heads,                                  # (NH, H)
        w3=w3.T, b3=b3.reshape(1, hidden_size),
        w5=w5.T, b5=b5.reshape(1, num_classes),
    )


def reference(x, len_of_oneTr, params):
    """Pure-JAX mirror of the PyTorch forward (eval-mode dropout)."""
    B, T, _ = x.shape
    NH, H = params["w_heads"].shape
    w_fused, bias = params["w_fused"], params["b_lstm"]
    lens = len_of_oneTr.astype(jnp.int32)[:, None]
    h0 = jnp.zeros((B, H), jnp.float32)
    c0 = jnp.zeros((B, H), jnp.float32)

    def scan_fn(carry, inp):
        h, c = carry
        x_t, t = inp
        gates = jnp.concatenate([x_t, h], axis=1) @ w_fused + bias
        i_g = jax.nn.sigmoid(gates[:, :H])
        f_g = jax.nn.sigmoid(gates[:, H:2 * H])
        g_g = jnp.tanh(gates[:, 2 * H:3 * H])
        o_g = jax.nn.sigmoid(gates[:, 3 * H:])
        c_new = f_g * c + i_g * g_g
        h_new = o_g * jnp.tanh(c_new)
        valid = t < lens
        h = jnp.where(valid, h_new, h)
        c = jnp.where(valid, c_new, c)
        return (h, c), jnp.where(valid, h_new, 0.0)

    (h1, _), outs = lax.scan(scan_fn, (h0, c0),
                             (jnp.transpose(x, (1, 0, 2)), jnp.arange(T)))
    ctx_sum = jnp.zeros((B, H), jnp.float32)
    for i in range(NH):
        wi = params["w_heads"][i]
        tmp = wi[None, None, :] * outs                    # (T, B, H)
        energies = jnp.einsum("bh,tbh->bt", h1, tmp)
        scores = jax.nn.softmax(energies, axis=1)
        ctx_sum = ctx_sum + jnp.einsum("bt,tbh->bh", scores, tmp)
    mean_ctx = ctx_sum / NH
    feat = jnp.concatenate([h1, mean_ctx], axis=1)
    hid = feat @ params["w3"] + params["b3"]
    return (hid @ params["w5"] + params["b5"])[None, :, :]


if __name__ == "__main__":
    B, T, I, H, NH, C = 2, 8, 8, 32, 2, 2
    key = jax.random.PRNGKey(0)
    kx, kp = jax.random.split(key)
    x = jax.random.normal(kx, (B, T, I), jnp.float32)
    len_of_oneTr = jnp.array([8, 5], jnp.int32)    # sorted descending (pack_padded)
    params = init_params(kp, I, H, NH, C)

    out = jax.block_until_ready(multi_head_attention_lstm(x, len_of_oneTr, params))
    ref = reference(x, len_of_oneTr, params)
    np.testing.assert_allclose(np.asarray(out), np.asarray(ref), rtol=1e-4, atol=1e-5)
    print("KERNEL_OK")
</pallas_src>

<mosaic_0001>
module attributes {stable_mosaic.version = 11 : i64} {
  func.func @mha_lstm_kernel(%arg0: memref<8x2x8xf32, #tpu.memory_space<vmem>>, %arg1: memref<2x1xi32, #tpu.memory_space<vmem>>, %arg2: memref<40x128xf32, #tpu.memory_space<vmem>>, %arg3: memref<1x128xf32, #tpu.memory_space<vmem>>, %arg4: memref<2x32xf32, #tpu.memory_space<vmem>>, %arg5: memref<64x32xf32, #tpu.memory_space<vmem>>, %arg6: memref<1x32xf32, #tpu.memory_space<vmem>>, %arg7: memref<32x2xf32, #tpu.memory_space<vmem>>, %arg8: memref<1x2xf32, #tpu.memory_space<vmem>>, %arg9: memref<2x2xf32, #tpu.memory_space<vmem>>, %arg10: memref<2x8x32xf32, #tpu.memory_space<vmem>>) attributes {dimension_semantics = [], scalar_prefetch = 0 : i64, scratch_operands = 1 : i64, tpu.core_type = #tpu.core_type<tc>} {
    %c0 = arith.constant 0 : index
    %c0_0 = arith.constant 0 : index
    %0 = vector.load %arg2[%c0, %c0_0] : memref<40x128xf32, #tpu.memory_space<vmem>>, vector<40x128xf32>
    %c0_1 = arith.constant 0 : index
    %c0_2 = arith.constant 0 : index
    %1 = vector.load %arg3[%c0_1, %c0_2] : memref<1x128xf32, #tpu.memory_space<vmem>>, vector<1x128xf32>
    %2 = vector.shape_cast %1 : vector<1x128xf32> to vector<1x128xf32>
    %3 = vector.broadcast %2 : vector<1x128xf32> to vector<2x128xf32>
    %c0_3 = arith.constant 0 : index
    %c0_4 = arith.constant 0 : index
    %4 = vector.load %arg1[%c0_3, %c0_4] : memref<2x1xi32, #tpu.memory_space<vmem>>, vector<2x1xi32>
    %c0_5 = arith.constant 0 : index
    %c0_6 = arith.constant 0 : index
    %5 = vector.load %arg4[%c0_5, %c0_6] : memref<2x32xf32, #tpu.memory_space<vmem>>, vector<2x32xf32>
    %cst = arith.constant 0.000000e+00 : f32
    %6 = vector.broadcast %cst : f32 to vector<2x32xf32>
    %cst_7 = arith.constant 0.000000e+00 : f32
    %7 = vector.broadcast %cst_7 : f32 to vector<2x32xf32>
    %c0_i32 = arith.constant 0 : i32
    %8 = arith.index_cast %c0_i32 : i32 to index
    %c0_8 = arith.constant 0 : index
    %c0_9 = arith.constant 0 : index
    %9 = vector.load %arg0[%8, %c0_8, %c0_9] : memref<8x2x8xf32, #tpu.memory_space<vmem>>, vector<1x2x8xf32>
    %10 = vector.shape_cast %9 : vector<1x2x8xf32> to vector<2x8xf32>
    %11 = tpu.concatenate %10, %6 in 1 : vector<2x8xf32>, vector<2x32xf32> -> vector<2x40xf32>
    %cst_10 = arith.constant dense<0.000000e+00> : vector<2x128xf32>
    %12 = tpu.matmul %11, %0, %cst_10 {dimension_numbers = #tpu.dot_dimension_numbers<[1], [0], [0], [1], [0, 0, 1, 1], [], []>} : vector<2x40xf32>, vector<40x128xf32>, vector<2x128xf32> -> vector<2x128xf32>
    %13 = arith.addf %12, %3 : vector<2x128xf32>
    %14 = vector.extract_strided_slice %13 {offsets = [0, 0], sizes = [2, 32], strides = [1, 1]} : vector<2x128xf32> to vector<2x32xf32>
    %15 = arith.negf %14 : vector<2x32xf32>
    %16 = math.exp %15 : vector<2x32xf32>
    %cst_11 = arith.constant 1.000000e+00 : f32
    %17 = vector.broadcast %cst_11 : f32 to vector<2x32xf32>
    %18 = arith.addf %17, %16 : vector<2x32xf32>
    %19 = arith.divf %17, %18 : vector<2x32xf32>
    %20 = vector.extract_strided_slice %13 {offsets = [0, 32], sizes = [2, 32], strides = [1, 1]} : vector<2x128xf32> to vector<2x32xf32>
    %21 = arith.negf %20 : vector<2x32xf32>
    %22 = math.exp %21 : vector<2x32xf32>
    %cst_12 = arith.constant 1.000000e+00 : f32
    %23 = vector.broadcast %cst_12 : f32 to vector<2x32xf32>
    %24 = arith.addf %23, %22 : vector<2x32xf32>
    %25 = arith.divf %23, %24 : vector<2x32xf32>
    %26 = vector.extract_strided_slice %13 {offsets = [0, 64], sizes = [2, 32], strides = [1, 1]} : vector<2x128xf32> to vector<2x32xf32>
    %27 = math.tanh %26 : vector<2x32xf32>
    %28 = vector.extract_strided_slice %13 {offsets = [0, 96], sizes = [2, 32], strides = [1, 1]} : vector<2x128xf32> to vector<2x32xf32>
    %29 = arith.negf %28 : vector<2x32xf32>
    %30 = math.exp %29 : vector<2x32xf32>
    %cst_13 = arith.constant 1.000000e+00 : f32
    %31 = vector.broadcast %cst_13 : f32 to vector<2x32xf32>
    %32 = arith.addf %31, %30 : vector<2x32xf32>
    %33 = arith.divf %31, %32 : vector<2x32xf32>
    %34 = arith.mulf %25, %7 : vector<2x32xf32>
    %35 = arith.mulf %19, %27 : vector<2x32xf32>
    %36 = arith.addf %34, %35 : vector<2x32xf32>
    %37 = math.tanh %36 : vector<2x32xf32>
    %38 = arith.mulf %33, %37 : vector<2x32xf32>
    %39 = vector.broadcast %c0_i32 : i32 to vector<2x1xi32>
    %40 = arith.cmpi slt, %39, %4 : vector<2x1xi32>
    %41 = vector.shape_cast %40 : vector<2x1xi1> to vector<2x1xi1>
    %42 = vector.broadcast %41 : vector<2x1xi1> to vector<2x32xi1>
    %43 = arith.select %42, %38, %6 : vector<2x32xi1>, vector<2x32xf32>
    %44 = vector.shape_cast %40 : vector<2x1xi1> to vector<2x1xi1>
    %45 = vector.broadcast %44 : vector<2x1xi1> to vector<2x32xi1>
    %46 = arith.select %45, %36, %7 : vector<2x32xi1>, vector<2x32xf32>
    %cst_14 = arith.constant 0.000000e+00 : f32
    %47 = vector.shape_cast %40 : vector<2x1xi1> to vector<2x1xi1>
    %48 = vector.broadcast %47 : vector<2x1xi1> to vector<2x32xi1>
    %49 = vector.broadcast %cst_14 : f32 to vector<2x32xf32>
    %50 = arith.select %48, %38, %49 : vector<2x32xi1>, vector<2x32xf32>
    %51 = vector.extract_strided_slice %50 {offsets = [0, 0], sizes = [1, 32], strides = [1, 1]} : vector<2x32xf32> to vector<1x32xf32>
    %c0_15 = arith.constant 0 : index
    %52 = arith.index_cast %c0_i32 : i32 to index
    %c0_16 = arith.constant 0 : index
    %53 = vector.load %arg10[%c0_15, %52, %c0_16] : memref<2x8x32xf32, #tpu.memory_space<vmem>>, vector<1x1x32xf32>
    %54 = vector.shape_cast %53 : vector<1x1x32xf32> to vector<1x32xf32>
    %55 = vector.shape_cast %51 : vector<1x32xf32> to vector<1x1x32xf32>
    tpu.vector_store %arg10[%c0_15, %52, %c0_16], %55 {strides = array<i32>} : memref<2x8x32xf32, #tpu.memory_space<vmem>>, vector<1x1x32xf32>,
    %56 = vector.extract_strided_slice %50 {offsets = [1, 0], sizes = [1, 32], strides = [1, 1]} : vector<2x32xf32> to vector<1x32xf32>
    %c1 = arith.constant 1 : index
    %57 = arith.index_cast %c0_i32 : i32 to index
    %c0_17 = arith.constant 0 : index
    %58 = vector.load %arg10[%c1, %57, %c0_17] : memref<2x8x32xf32, #tpu.memory_space<vmem>>, vector<1x1x32xf32>
    %59 = vector.shape_cast %58 : vector<1x1x32xf32> to vector<1x32xf32>
    %60 = vector.shape_cast %56 : vector<1x32xf32> to vector<1x1x32xf32>
    tpu.vector_store %arg10[%c1, %57, %c0_17], %60 {strides = array<i32>} : memref<2x8x32xf32, #tpu.memory_space<vmem>>, vector<1x1x32xf32>,
    %c1_i32 = arith.constant 1 : i32
    %61 = arith.index_cast %c1_i32 : i32 to index
    %c0_18 = arith.constant 0 : index
    %c0_19 = arith.constant 0 : index
    %62 = vector.load %arg0[%61, %c0_18, %c0_19] : memref<8x2x8xf32, #tpu.memory_space<vmem>>, vector<1x2x8xf32>
    %63 = vector.shape_cast %62 : vector<1x2x8xf32> to vector<2x8xf32>
    %64 = tpu.concatenate %63, %43 in 1 : vector<2x8xf32>, vector<2x32xf32> -> vector<2x40xf32>
    %cst_20 = arith.constant dense<0.000000e+00> : vector<2x128xf32>
    %65 = tpu.matmul %64, %0, %cst_20 {dimension_numbers = #tpu.dot_dimension_numbers<[1], [0], [0], [1], [0, 0, 1, 1], [], []>} : vector<2x40xf32>, vector<40x128xf32>, vector<2x128xf32> -> vector<2x128xf32>
    %66 = arith.addf %65, %3 : vector<2x128xf32>
    %67 = vector.extract_strided_slice %66 {offsets = [0, 0], sizes = [2, 32], strides = [1, 1]} : vector<2x128xf32> to vector<2x32xf32>
    %68 = arith.negf %67 : vector<2x32xf32>
    %69 = math.exp %68 : vector<2x32xf32>
    %cst_21 = arith.constant 1.000000e+00 : f32
    %70 = vector.broadcast %cst_21 : f32 to vector<2x32xf32>
    %71 = arith.addf %70, %69 : vector<2x32xf32>
    %72 = arith.divf %70, %71 : vector<2x32xf32>
    %73 = vector.extract_strided_slice %66 {offsets = [0, 32], sizes = [2, 32], strides = [1, 1]} : vector<2x128xf32> to vector<2x32xf32>
    %74 = arith.negf %73 : vector<2x32xf32>
    %75 = math.exp %74 : vector<2x32xf32>
    %cst_22 = arith.constant 1.000000e+00 : f32
    %76 = vector.broadcast %cst_22 : f32 to vector<2x32xf32>
    %77 = arith.addf %76, %75 : vector<2x32xf32>
    %78 = arith.divf %76, %77 : vector<2x32xf32>
    %79 = vector.extract_strided_slice %66 {offsets = [0, 64], sizes = [2, 32], strides = [1, 1]} : vector<2x128xf32> to vector<2x32xf32>
    %80 = math.tanh %79 : vector<2x32xf32>
    %81 = vector.extract_strided_slice %66 {offsets = [0, 96], sizes = [2, 32], strides = [1, 1]} : vector<2x128xf32> to vector<2x32xf32>
    %82 = arith.negf %81 : vector<2x32xf32>
    %83 = math.exp %82 : vector<2x32xf32>
    %cst_23 = arith.constant 1.000000e+00 : f32
    %84 = vector.broadcast %cst_23 : f32 to vector<2x32xf32>
    %85 = arith.addf %84, %83 : vector<2x32xf32>
    %86 = arith.divf %84, %85 : vector<2x32xf32>
    %87 = arith.mulf %78, %46 : vector<2x32xf32>
    %88 = arith.mulf %72, %80 : vector<2x32xf32>
    %89 = arith.addf %87, %88 : vector<2x32xf32>
    %90 = math.tanh %89 : vector<2x32xf32>
    %91 = arith.mulf %86, %90 : vector<2x32xf32>
    %92 = vector.broadcast %c1_i32 : i32 to vector<2x1xi32>
    %93 = arith.cmpi slt, %92, %4 : vector<2x1xi32>
    %94 = vector.shape_cast %93 : vector<2x1xi1> to vector<2x1xi1>
    %95 = vector.broadcast %94 : vector<2x1xi1> to vector<2x32xi1>
    %96 = arith.select %95, %91, %43 : vector<2x32xi1>, vector<2x32xf32>
    %97 = vector.shape_cast %93 : vector<2x1xi1> to vector<2x1xi1>
    %98 = vector.broadcast %97 : vector<2x1xi1> to vector<2x32xi1>
    %99 = arith.select %98, %89, %46 : vector<2x32xi1>, vector<2x32xf32>
    %cst_24 = arith.constant 0.000000e+00 : f32
    %100 = vector.shape_cast %93 : vector<2x1xi1> to vector<2x1xi1>
    %101 = vector.broadcast %100 : vector<2x1xi1> to vector<2x32xi1>
    %102 = vector.broadcast %cst_24 : f32 to vector<2x32xf32>
    %103 = arith.select %101, %91, %102 : vector<2x32xi1>, vector<2x32xf32>
    %104 = vector.extract_strided_slice %103 {offsets = [0, 0], sizes = [1, 32], strides = [1, 1]} : vector<2x32xf32> to vector<1x32xf32>
    %c0_25 = arith.constant 0 : index
    %105 = arith.index_cast %c1_i32 : i32 to index
    %c0_26 = arith.constant 0 : index
    %106 = vector.load %arg10[%c0_25, %105, %c0_26] : memref<2x8x32xf32, #tpu.memory_space<vmem>>, vector<1x1x32xf32>
    %107 = vector.shape_cast %106 : vector<1x1x32xf32> to vector<1x32xf32>
    %108 = vector.shape_cast %104 : vector<1x32xf32> to vector<1x1x32xf32>
    tpu.vector_store %arg10[%c0_25, %105, %c0_26], %108 {strides = array<i32>} : memref<2x8x32xf32, #tpu.memory_space<vmem>>, vector<1x1x32xf32>,
    %109 = vector.extract_strided_slice %103 {offsets = [1, 0], sizes = [1, 32], strides = [1, 1]} : vector<2x32xf32> to vector<1x32xf32>
    %c1_27 = arith.constant 1 : index
    %110 = arith.index_cast %c1_i32 : i32 to index
    %c0_28 = arith.constant 0 : index
    %111 = vector.load %arg10[%c1_27, %110, %c0_28] : memref<2x8x32xf32, #tpu.memory_space<vmem>>, vector<1x1x32xf32>
    %112 = vector.shape_cast %111 : vector<1x1x32xf32> to vector<1x32xf32>
    %113 = vector.shape_cast %109 : vector<1x32xf32> to vector<1x1x32xf32>
    tpu.vector_store %arg10[%c1_27, %110, %c0_28], %113 {strides = array<i32>} : memref<2x8x32xf32, #tpu.memory_space<vmem>>, vector<1x1x32xf32>,
    %c2_i32 = arith.constant 2 : i32
    %114 = arith.index_cast %c2_i32 : i32 to index
    %c0_29 = arith.constant 0 : index
    %c0_30 = arith.constant 0 : index
    %115 = vector.load %arg0[%114, %c0_29, %c0_30] : memref<8x2x8xf32, #tpu.memory_space<vmem>>, vector<1x2x8xf32>
    %116 = vector.shape_cast %115 : vector<1x2x8xf32> to vector<2x8xf32>
    %117 = tpu.concatenate %116, %96 in 1 : vector<2x8xf32>, vector<2x32xf32> -> vector<2x40xf32>
    %cst_31 = arith.constant dense<0.000000e+00> : vector<2x128xf32>
    %118 = tpu.matmul %117, %0, %cst_31 {dimension_numbers = #tpu.dot_dimension_numbers<[1], [0], [0], [1], [0, 0, 1, 1], [], []>} : vector<2x40xf32>, vector<40x128xf32>, vector<2x128xf32> -> vector<2x128xf32>
    %119 = arith.addf %118, %3 : vector<2x128xf32>
    %120 = vector.extract_strided_slice %119 {offsets = [0, 0], sizes = [2, 32], strides = [1, 1]} : vector<2x128xf32> to vector<2x32xf32>
    %121 = arith.negf %120 : vector<2x32xf32>
    %122 = math.exp %121 : vector<2x32xf32>
    %cst_32 = arith.constant 1.000000e+00 : f32
    %123 = vector.broadcast %cst_32 : f32 to vector<2x32xf32>
    %124 = arith.addf %123, %122 : vector<2x32xf32>
    %125 = arith.divf %123, %124 : vector<2x32xf32>
    %126 = vector.extract_strided_slice %119 {offsets = [0, 32], sizes = [2, 32], strides = [1, 1]} : vector<2x128xf32> to vector<2x32xf32>
    %127 = arith.negf %126 : vector<2x32xf32>
    %128 = math.exp %127 : vector<2x32xf32>
    %cst_33 = arith.constant 1.000000e+00 : f32
    %129 = vector.broadcast %cst_33 : f32 to vector<2x32xf32>
    %130 = arith.addf %129, %128 : vector<2x32xf32>
    %131 = arith.divf %129, %130 : vector<2x32xf32>
    %132 = vector.extract_strided_slice %119 {offsets = [0, 64], sizes = [2, 32], strides = [1, 1]} : vector<2x128xf32> to vector<2x32xf32>
    %133 = math.tanh %132 : vector<2x32xf32>
    %134 = vector.extract_strided_slice %119 {offsets = [0, 96], sizes = [2, 32], strides = [1, 1]} : vector<2x128xf32> to vector<2x32xf32>
    %135 = arith.negf %134 : vector<2x32xf32>
    %136 = math.exp %135 : vector<2x32xf32>
    %cst_34 = arith.constant 1.000000e+00 : f32
    %137 = vector.broadcast %cst_34 : f32 to vector<2x32xf32>
    %138 = arith.addf %137, %136 : vector<2x32xf32>
    %139 = arith.divf %137, %138 : vector<2x32xf32>
    %140 = arith.mulf %131, %99 : vector<2x32xf32>
    %141 = arith.mulf %125, %133 : vector<2x32xf32>
    %142 = arith.addf %140, %141 : vector<2x32xf32>
    %143 = math.tanh %142 : vector<2x32xf32>
    %144 = arith.mulf %139, %143 : vector<2x32xf32>
    %145 = vector.broadcast %c2_i32 : i32 to vector<2x1xi32>
    %146 = arith.cmpi slt, %145, %4 : vector<2x1xi32>
    %147 = vector.shape_cast %146 : vector<2x1xi1> to vector<2x1xi1>
    %148 = vector.broadcast %147 : vector<2x1xi1> to vector<2x32xi1>
    %149 = arith.select %148, %144, %96 : vector<2x32xi1>, vector<2x32xf32>
    %150 = vector.shape_cast %146 : vector<2x1xi1> to vector<2x1xi1>
    %151 = vector.broadcast %150 : vector<2x1xi1> to vector<2x32xi1>
    %152 = arith.select %151, %142, %99 : vector<2x32xi1>, vector<2x32xf32>
    %cst_35 = arith.constant 0.000000e+00 : f32
    %153 = vector.shape_cast %146 : vector<2x1xi1> to vector<2x1xi1>
    %154 = vector.broadcast %153 : vector<2x1xi1> to vector<2x32xi1>
    %155 = vector.broadcast %cst_35 : f32 to vector<2x32xf32>
    %156 = arith.select %154, %144, %155 : vector<2x32xi1>, vector<2x32xf32>
    %157 = vector.extract_strided_slice %156 {offsets = [0, 0], sizes = [1, 32], strides = [1, 1]} : vector<2x32xf32> to vector<1x32xf32>
    %c0_36 = arith.constant 0 : index
    %158 = arith.index_cast %c2_i32 : i32 to index
    %c0_37 = arith.constant 0 : index
    %159 = vector.load %arg10[%c0_36, %158, %c0_37] : memref<2x8x32xf32, #tpu.memory_space<vmem>>, vector<1x1x32xf32>
    %160 = vector.shape_cast %159 : vector<1x1x32xf32> to vector<1x32xf32>
    %161 = vector.shape_cast %157 : vector<1x32xf32> to vector<1x1x32xf32>
    tpu.vector_store %arg10[%c0_36, %158, %c0_37], %161 {strides = array<i32>} : memref<2x8x32xf32, #tpu.memory_space<vmem>>, vector<1x1x32xf32>,
    %162 = vector.extract_strided_slice %156 {offsets = [1, 0], sizes = [1, 32], strides = [1, 1]} : vector<2x32xf32> to vector<1x32xf32>
    %c1_38 = arith.constant 1 : index
    %163 = arith.index_cast %c2_i32 : i32 to index
    %c0_39 = arith.constant 0 : index
    %164 = vector.load %arg10[%c1_38, %163, %c0_39] : memref<2x8x32xf32, #tpu.memory_space<vmem>>, vector<1x1x32xf32>
    %165 = vector.shape_cast %164 : vector<1x1x32xf32> to vector<1x32xf32>
    %166 = vector.shape_cast %162 : vector<1x32xf32> to vector<1x1x32xf32>
    tpu.vector_store %arg10[%c1_38, %163, %c0_39], %166 {strides = array<i32>} : memref<2x8x32xf32, #tpu.memory_space<vmem>>, vector<1x1x32xf32>,
    %c3_i32 = arith.constant 3 : i32
    %167 = arith.index_cast %c3_i32 : i32 to index
    %c0_40 = arith.constant 0 : index
    %c0_41 = arith.constant 0 : index
    %168 = vector.load %arg0[%167, %c0_40, %c0_41] : memref<8x2x8xf32, #tpu.memory_space<vmem>>, vector<1x2x8xf32>
    %169 = vector.shape_cast %168 : vector<1x2x8xf32> to vector<2x8xf32>
    %170 = tpu.concatenate %169, %149 in 1 : vector<2x8xf32>, vector<2x32xf32> -> vector<2x40xf32>
    %cst_42 = arith.constant dense<0.000000e+00> : vector<2x128xf32>
    %171 = tpu.matmul %170, %0, %cst_42 {dimension_numbers = #tpu.dot_dimension_numbers<[1], [0], [0], [1], [0, 0, 1, 1], [], []>} : vector<2x40xf32>, vector<40x128xf32>, vector<2x128xf32> -> vector<2x128xf32>
    %172 = arith.addf %171, %3 : vector<2x128xf32>
    %173 = vector.extract_strided_slice %172 {offsets = [0, 0], sizes = [2, 32], strides = [1, 1]} : vector<2x128xf32> to vector<2x32xf32>
    %174 = arith.negf %173 : vector<2x32xf32>
    %175 = math.exp %174 : vector<2x32xf32>
    %cst_43 = arith.constant 1.000000e+00 : f32
    %176 = vector.broadcast %cst_43 : f32 to vector<2x32xf32>
    %177 = arith.addf %176, %175 : vector<2x32xf32>
    %178 = arith.divf %176, %177 : vector<2x32xf32>
    %179 = vector.extract_strided_slice %172 {offsets = [0, 32], sizes = [2, 32], strides = [1, 1]} : vector<2x128xf32> to vector<2x32xf32>
    %180 = arith.negf %179 : vector<2x32xf32>
    %181 = math.exp %180 : vector<2x32xf32>
    %cst_44 = arith.constant 1.000000e+00 : f32
    %182 = vector.broadcast %cst_44 : f32 to vector<2x32xf32>
    %183 = arith.addf %182, %181 : vector<2x32xf32>
    %184 = arith.divf %182, %183 : vector<2x32xf32>
    %185 = vector.extract_strided_slice %172 {offsets = [0, 64], sizes = [2, 32], strides = [1, 1]} : vector<2x128xf32> to vector<2x32xf32>
    %186 = math.tanh %185 : vector<2x32xf32>
    %187 = vector.extract_strided_slice %172 {offsets = [0, 96], sizes = [2, 32], strides = [1, 1]} : vector<2x128xf32> to vector<2x32xf32>
    %188 = arith.negf %187 : vector<2x32xf32>
    %189 = math.exp %188 : vector<2x32xf32>
    %cst_45 = arith.constant 1.000000e+00 : f32
    %190 = vector.broadcast %cst_45 : f32 to vector<2x32xf32>
    %191 = arith.addf %190, %189 : vector<2x32xf32>
    %192 = arith.divf %190, %191 : vector<2x32xf32>
    %193 = arith.mulf %184, %152 : vector<2x32xf32>
    %194 = arith.mulf %178, %186 : vector<2x32xf32>
    %195 = arith.addf %193, %194 : vector<2x32xf32>
    %196 = math.tanh %195 : vector<2x32xf32>
    %197 = arith.mulf %192, %196 : vector<2x32xf32>
    %198 = vector.broadcast %c3_i32 : i32 to vector<2x1xi32>
    %199 = arith.cmpi slt, %198, %4 : vector<2x1xi32>
    %200 = vector.shape_cast %199 : vector<2x1xi1> to vector<2x1xi1>
    %201 = vector.broadcast %200 : vector<2x1xi1> to vector<2x32xi1>
    %202 = arith.select %201, %197, %149 : vector<2x32xi1>, vector<2x32xf32>
    %203 = vector.shape_cast %199 : vector<2x1xi1> to vector<2x1xi1>
    %204 = vector.broadcast %203 : vector<2x1xi1> to vector<2x32xi1>
    %205 = arith.select %204, %195, %152 : vector<2x32xi1>, vector<2x32xf32>
    %cst_46 = arith.constant 0.000000e+00 : f32
    %206 = vector.shape_cast %199 : vector<2x1xi1> to vector<2x1xi1>
    %207 = vector.broadcast %206 : vector<2x1xi1> to vector<2x32xi1>
    %208 = vector.broadcast %cst_46 : f32 to vector<2x32xf32>
    %209 = arith.select %207, %197, %208 : vector<2x32xi1>, vector<2x32xf32>
    %210 = vector.extract_strided_slice %209 {offsets = [0, 0], sizes = [1, 32], strides = [1, 1]} : vector<2x32xf32> to vector<1x32xf32>
    %c0_47 = arith.constant 0 : index
    %211 = arith.index_cast %c3_i32 : i32 to index
    %c0_48 = arith.constant 0 : index
    %212 = vector.load %arg10[%c0_47, %211, %c0_48] : memref<2x8x32xf32, #tpu.memory_space<vmem>>, vector<1x1x32xf32>
    %213 = vector.shape_cast %212 : vector<1x1x32xf32> to vector<1x32xf32>
    %214 = vector.shape_cast %210 : vector<1x32xf32> to vector<1x1x32xf32>
    tpu.vector_store %arg10[%c0_47, %211, %c0_48], %214 {strides = array<i32>} : memref<2x8x32xf32, #tpu.memory_space<vmem>>, vector<1x1x32xf32>,
    %215 = vector.extract_strided_slice %209 {offsets = [1, 0], sizes = [1, 32], strides = [1, 1]} : vector<2x32xf32> to vector<1x32xf32>
    %c1_49 = arith.constant 1 : index
    %216 = arith.index_cast %c3_i32 : i32 to index
    %c0_50 = arith.constant 0 : index
    %217 = vector.load %arg10[%c1_49, %216, %c0_50] : memref<2x8x32xf32, #tpu.memory_space<vmem>>, vector<1x1x32xf32>
    %218 = vector.shape_cast %217 : vector<1x1x32xf32> to vector<1x32xf32>
    %219 = vector.shape_cast %215 : vector<1x32xf32> to vector<1x1x32xf32>
    tpu.vector_store %arg10[%c1_49, %216, %c0_50], %219 {strides = array<i32>} : memref<2x8x32xf32, #tpu.memory_space<vmem>>, vector<1x1x32xf32>,
    %c4_i32 = arith.constant 4 : i32
    %220 = arith.index_cast %c4_i32 : i32 to index
    %c0_51 = arith.constant 0 : index
    %c0_52 = arith.constant 0 : index
    %221 = vector.load %arg0[%220, %c0_51, %c0_52] : memref<8x2x8xf32, #tpu.memory_space<vmem>>, vector<1x2x8xf32>
    %222 = vector.shape_cast %221 : vector<1x2x8xf32> to vector<2x8xf32>
    %223 = tpu.concatenate %222, %202 in 1 : vector<2x8xf32>, vector<2x32xf32> -> vector<2x40xf32>
    %cst_53 = arith.constant dense<0.000000e+00> : vector<2x128xf32>
    %224 = tpu.matmul %223, %0, %cst_53 {dimension_numbers = #tpu.dot_dimension_numbers<[1], [0], [0], [1], [0, 0, 1, 1], [], []>} : vector<2x40xf32>, vector<40x128xf32>, vector<2x128xf32> -> vector<2x128xf32>
    %225 = arith.addf %224, %3 : vector<2x128xf32>
    %226 = vector.extract_strided_slice %225 {offsets = [0, 0], sizes = [2, 32], strides = [1, 1]} : vector<2x128xf32> to vector<2x32xf32>
    %227 = arith.negf %226 : vector<2x32xf32>
    %228 = math.exp %227 : vector<2x32xf32>
    %cst_54 = arith.constant 1.000000e+00 : f32
    %229 = vector.broadcast %cst_54 : f32 to vector<2x32xf32>
    %230 = arith.addf %229, %228 : vector<2x32xf32>
    %231 = arith.divf %229, %230 : vector<2x32xf32>
    %232 = vector.extract_strided_slice %225 {offsets = [0, 32], sizes = [2, 32], strides = [1, 1]} : vector<2x128xf32> to vector<2x32xf32>
    %233 = arith.negf %232 : vector<2x32xf32>
    %234 = math.exp %233 : vector<2x32xf32>
    %cst_55 = arith.constant 1.000000e+00 : f32
    %235 = vector.broadcast %cst_55 : f32 to vector<2x32xf32>
    %236 = arith.addf %235, %234 : vector<2x32xf32>
    %237 = arith.divf %235, %236 : vector<2x32xf32>
    %238 = vector.extract_strided_slice %225 {offsets = [0, 64], sizes = [2, 32], strides = [1, 1]} : vector<2x128xf32> to vector<2x32xf32>
    %239 = math.tanh %238 : vector<2x32xf32>
    %240 = vector.extract_strided_slice %225 {offsets = [0, 96], sizes = [2, 32], strides = [1, 1]} : vector<2x128xf32> to vector<2x32xf32>
    %241 = arith.negf %240 : vector<2x32xf32>
    %242 = math.exp %241 : vector<2x32xf32>
    %cst_56 = arith.constant 1.000000e+00 : f32
    %243 = vector.broadcast %cst_56 : f32 to vector<2x32xf32>
    %244 = arith.addf %243, %242 : vector<2x32xf32>
    %245 = arith.divf %243, %244 : vector<2x32xf32>
    %246 = arith.mulf %237, %205 : vector<2x32xf32>
    %247 = arith.mulf %231, %239 : vector<2x32xf32>
    %248 = arith.addf %246, %247 : vector<2x32xf32>
    %249 = math.tanh %248 : vector<2x32xf32>
    %250 = arith.mulf %245, %249 : vector<2x32xf32>
    %251 = vector.broadcast %c4_i32 : i32 to vector<2x1xi32>
    %252 = arith.cmpi slt, %251, %4 : vector<2x1xi32>
    %253 = vector.shape_cast %252 : vector<2x1xi1> to vector<2x1xi1>
    %254 = vector.broadcast %253 : vector<2x1xi1> to vector<2x32xi1>
    %255 = arith.select %254, %250, %202 : vector<2x32xi1>, vector<2x32xf32>
    %256 = vector.shape_cast %252 : vector<2x1xi1> to vector<2x1xi1>
    %257 = vector.broadcast %256 : vector<2x1xi1> to vector<2x32xi1>
    %258 = arith.select %257, %248, %205 : vector<2x32xi1>, vector<2x32xf32>
    %cst_57 = arith.constant 0.000000e+00 : f32
    %259 = vector.shape_cast %252 : vector<2x1xi1> to vector<2x1xi1>
    %260 = vector.broadcast %259 : vector<2x1xi1> to vector<2x32xi1>
    %261 = vector.broadcast %cst_57 : f32 to vector<2x32xf32>
    %262 = arith.select %260, %250, %261 : vector<2x32xi1>, vector<2x32xf32>
    %263 = vector.extract_strided_slice %262 {offsets = [0, 0], sizes = [1, 32], strides = [1, 1]} : vector<2x32xf32> to vector<1x32xf32>
    %c0_58 = arith.constant 0 : index
    %264 = arith.index_cast %c4_i32 : i32 to index
    %c0_59 = arith.constant 0 : index
    %265 = vector.load %arg10[%c0_58, %264, %c0_59] : memref<2x8x32xf32, #tpu.memory_space<vmem>>, vector<1x1x32xf32>
    %266 = vector.shape_cast %265 : vector<1x1x32xf32> to vector<1x32xf32>
    %267 = vector.shape_cast %263 : vector<1x32xf32> to vector<1x1x32xf32>
    tpu.vector_store %arg10[%c0_58, %264, %c0_59], %267 {strides = array<i32>} : memref<2x8x32xf32, #tpu.memory_space<vmem>>, vector<1x1x32xf32>,
    %268 = vector.extract_strided_slice %262 {offsets = [1, 0], sizes = [1, 32], strides = [1, 1]} : vector<2x32xf32> to vector<1x32xf32>
    %c1_60 = arith.constant 1 : index
    %269 = arith.index_cast %c4_i32 : i32 to index
    %c0_61 = arith.constant 0 : index
    %270 = vector.load %arg10[%c1_60, %269, %c0_61] : memref<2x8x32xf32, #tpu.memory_space<vmem>>, vector<1x1x32xf32>
    %271 = vector.shape_cast %270 : vector<1x1x32xf32> to vector<1x32xf32>
    %272 = vector.shape_cast %268 : vector<1x32xf32> to vector<1x1x32xf32>
    tpu.vector_store %arg10[%c1_60, %269, %c0_61], %272 {strides = array<i32>} : memref<2x8x32xf32, #tpu.memory_space<vmem>>, vector<1x1x32xf32>,
    %c5_i32 = arith.constant 5 : i32
    %273 = arith.index_cast %c5_i32 : i32 to index
    %c0_62 = arith.constant 0 : index
    %c0_63 = arith.constant 0 : index
    %274 = vector.load %arg0[%273, %c0_62, %c0_63] : memref<8x2x8xf32, #tpu.memory_space<vmem>>, vector<1x2x8xf32>
    %275 = vector.shape_cast %274 : vector<1x2x8xf32> to vector<2x8xf32>
    %276 = tpu.concatenate %275, %255 in 1 : vector<2x8xf32>, vector<2x32xf32> -> vector<2x40xf32>
    %cst_64 = arith.constant dense<0.000000e+00> : vector<2x128xf32>
    %277 = tpu.matmul %276, %0, %cst_64 {dimension_numbers = #tpu.dot_dimension_numbers<[1], [0], [0], [1], [0, 0, 1, 1], [], []>} : vector<2x40xf32>, vector<40x128xf32>, vector<2x128xf32> -> vector<2x128xf32>
    %278 = arith.addf %277, %3 : vector<2x128xf32>
    %279 = vector.extract_strided_slice %278 {offsets = [0, 0], sizes = [2, 32], strides = [1, 1]} : vector<2x128xf32> to vector<2x32xf32>
    %280 = arith.negf %279 : vector<2x32xf32>
    %281 = math.exp %280 : vector<2x32xf32>
    %cst_65 = arith.constant 1.000000e+00 : f32
    %282 = vector.broadcast %cst_65 : f32 to vector<2x32xf32>
    %283 = arith.addf %282, %281 : vector<2x32xf32>
    %284 = arith.divf %282, %283 : vector<2x32xf32>
    %285 = vector.extract_strided_slice %278 {offsets = [0, 32], sizes = [2, 32], strides = [1, 1]} : vector<2x128xf32> to vector<2x32xf32>
    %286 = arith.negf %285 : vector<2x32xf32>
    %287 = math.exp %286 : vector<2x32xf32>
    %cst_66 = arith.constant 1.000000e+00 : f32
    %288 = vector.broadcast %cst_66 : f32 to vector<2x32xf32>
    %289 = arith.addf %288, %287 : vector<2x32xf32>
    %290 = arith.divf %288, %289 : vector<2x32xf32>
    %291 = vector.extract_strided_slice %278 {offsets = [0, 64], sizes = [2, 32], strides = [1, 1]} : vector<2x128xf32> to vector<2x32xf32>
    %292 = math.tanh %291 : vector<2x32xf32>
    %293 = vector.extract_strided_slice %278 {offsets = [0, 96], sizes = [2, 32], strides = [1, 1]} : vector<2x128xf32> to vector<2x32xf32>
    %294 = arith.negf %293 : vector<2x32xf32>
    %295 = math.exp %294 : vector<2x32xf32>
    %cst_67 = arith.constant 1.000000e+00 : f32
    %296 = vector.broadcast %cst_67 : f32 to vector<2x32xf32>
    %297 = arith.addf %296, %295 : vector<2x32xf32>
    %298 = arith.divf %296, %297 : vector<2x32xf32>
    %299 = arith.mulf %290, %258 : vector<2x32xf32>
    %300 = arith.mulf %284, %292 : vector<2x32xf32>
    %301 = arith.addf %299, %300 : vector<2x32xf32>
    %302 = math.tanh %301 : vector<2x32xf32>
    %303 = arith.mulf %298, %302 : vector<2x32xf32>
    %304 = vector.broadcast %c5_i32 : i32 to vector<2x1xi32>
    %305 = arith.cmpi slt, %304, %4 : vector<2x1xi32>
    %306 = vector.shape_cast %305 : vector<2x1xi1> to vector<2x1xi1>
    %307 = vector.broadcast %306 : vector<2x1xi1> to vector<2x32xi1>
    %308 = arith.select %307, %303, %255 : vector<2x32xi1>, vector<2x32xf32>
    %309 = vector.shape_cast %305 : vector<2x1xi1> to vector<2x1xi1>
    %310 = vector.broadcast %309 : vector<2x1xi1> to vector<2x32xi1>
    %311 = arith.select %310, %301, %258 : vector<2x32xi1>, vector<2x32xf32>
    %cst_68 = arith.constant 0.000000e+00 : f32
    %312 = vector.shape_cast %305 : vector<2x1xi1> to vector<2x1xi1>
    %313 = vector.broadcast %312 : vector<2x1xi1> to vector<2x32xi1>
    %314 = vector.broadcast %cst_68 : f32 to vector<2x32xf32>
    %315 = arith.select %313, %303, %314 : vector<2x32xi1>, vector<2x32xf32>
    %316 = vector.extract_strided_slice %315 {offsets = [0, 0], sizes = [1, 32], strides = [1, 1]} : vector<2x32xf32> to vector<1x32xf32>
    %c0_69 = arith.constant 0 : index
    %317 = arith.index_cast %c5_i32 : i32 to index
    %c0_70 = arith.constant 0 : index
    %318 = vector.load %arg10[%c0_69, %317, %c0_70] : memref<2x8x32xf32, #tpu.memory_space<vmem>>, vector<1x1x32xf32>
    %319 = vector.shape_cast %318 : vector<1x1x32xf32> to vector<1x32xf32>
    %320 = vector.shape_cast %316 : vector<1x32xf32> to vector<1x1x32xf32>
    tpu.vector_store %arg10[%c0_69, %317, %c0_70], %320 {strides = array<i32>} : memref<2x8x32xf32, #tpu.memory_space<vmem>>, vector<1x1x32xf32>,
    %321 = vector.extract_strided_slice %315 {offsets = [1, 0], sizes = [1, 32], strides = [1, 1]} : vector<2x32xf32> to vector<1x32xf32>
    %c1_71 = arith.constant 1 : index
    %322 = arith.index_cast %c5_i32 : i32 to index
    %c0_72 = arith.constant 0 : index
    %323 = vector.load %arg10[%c1_71, %322, %c0_72] : memref<2x8x32xf32, #tpu.memory_space<vmem>>, vector<1x1x32xf32>
    %324 = vector.shape_cast %323 : vector<1x1x32xf32> to vector<1x32xf32>
    %325 = vector.shape_cast %321 : vector<1x32xf32> to vector<1x1x32xf32>
    tpu.vector_store %arg10[%c1_71, %322, %c0_72], %325 {strides = array<i32>} : memref<2x8x32xf32, #tpu.memory_space<vmem>>, vector<1x1x32xf32>,
    %c6_i32 = arith.constant 6 : i32
    %326 = arith.index_cast %c6_i32 : i32 to index
    %c0_73 = arith.constant 0 : index
    %c0_74 = arith.constant 0 : index
    %327 = vector.load %arg0[%326, %c0_73, %c0_74] : memref<8x2x8xf32, #tpu.memory_space<vmem>>, vector<1x2x8xf32>
    %328 = vector.shape_cast %327 : vector<1x2x8xf32> to vector<2x8xf32>
    %329 = tpu.concatenate %328, %308 in 1 : vector<2x8xf32>, vector<2x32xf32> -> vector<2x40xf32>
    %cst_75 = arith.constant dense<0.000000e+00> : vector<2x128xf32>
    %330 = tpu.matmul %329, %0, %cst_75 {dimension_numbers = #tpu.dot_dimension_numbers<[1], [0], [0], [1], [0, 0, 1, 1], [], []>} : vector<2x40xf32>, vector<40x128xf32>, vector<2x128xf32> -> vector<2x128xf32>
    %331 = arith.addf %330, %3 : vector<2x128xf32>
    %332 = vector.extract_strided_slice %331 {offsets = [0, 0], sizes = [2, 32], strides = [1, 1]} : vector<2x128xf32> to vector<2x32xf32>
    %333 = arith.negf %332 : vector<2x32xf32>
    %334 = math.exp %333 : vector<2x32xf32>
    %cst_76 = arith.constant 1.000000e+00 : f32
    %335 = vector.broadcast %cst_76 : f32 to vector<2x32xf32>
    %336 = arith.addf %335, %334 : vector<2x32xf32>
    %337 = arith.divf %335, %336 : vector<2x32xf32>
    %338 = vector.extract_strided_slice %331 {offsets = [0, 32], sizes = [2, 32], strides = [1, 1]} : vector<2x128xf32> to vector<2x32xf32>
    %339 = arith.negf %338 : vector<2x32xf32>
    %340 = math.exp %339 : vector<2x32xf32>
    %cst_77 = arith.constant 1.000000e+00 : f32
    %341 = vector.broadcast %cst_77 : f32 to vector<2x32xf32>
    %342 = arith.addf %341, %340 : vector<2x32xf32>
    %343 = arith.divf %341, %342 : vector<2x32xf32>
    %344 = vector.extract_strided_slice %331 {offsets = [0, 64], sizes = [2, 32], strides = [1, 1]} : vector<2x128xf32> to vector<2x32xf32>
    %345 = math.tanh %344 : vector<2x32xf32>
    %346 = vector.extract_strided_slice %331 {offsets = [0, 96], sizes = [2, 32], strides = [1, 1]} : vector<2x128xf32> to vector<2x32xf32>
    %347 = arith.negf %346 : vector<2x32xf32>
    %348 = math.exp %347 : vector<2x32xf32>
    %cst_78 = arith.constant 1.000000e+00 : f32
    %349 = vector.broadcast %cst_78 : f32 to vector<2x32xf32>
    %350 = arith.addf %349, %348 : vector<2x32xf32>
    %351 = arith.divf %349, %350 : vector<2x32xf32>
    %352 = arith.mulf %343, %311 : vector<2x32xf32>
    %353 = arith.mulf %337, %345 : vector<2x32xf32>
    %354 = arith.addf %352, %353 : vector<2x32xf32>
    %355 = math.tanh %354 : vector<2x32xf32>
    %356 = arith.mulf %351, %355 : vector<2x32xf32>
    %357 = vector.broadcast %c6_i32 : i32 to vector<2x1xi32>
    %358 = arith.cmpi slt, %357, %4 : vector<2x1xi32>
    %359 = vector.shape_cast %358 : vector<2x1xi1> to vector<2x1xi1>
    %360 = vector.broadcast %359 : vector<2x1xi1> to vector<2x32xi1>
    %361 = arith.select %360, %356, %308 : vector<2x32xi1>, vector<2x32xf32>
    %362 = vector.shape_cast %358 : vector<2x1xi1> to vector<2x1xi1>
    %363 = vector.broadcast %362 : vector<2x1xi1> to vector<2x32xi1>
    %364 = arith.select %363, %354, %311 : vector<2x32xi1>, vector<2x32xf32>
    %cst_79 = arith.constant 0.000000e+00 : f32
    %365 = vector.shape_cast %358 : vector<2x1xi1> to vector<2x1xi1>
    %366 = vector.broadcast %365 : vector<2x1xi1> to vector<2x32xi1>
    %367 = vector.broadcast %cst_79 : f32 to vector<2x32xf32>
    %368 = arith.select %366, %356, %367 : vector<2x32xi1>, vector<2x32xf32>
    %369 = vector.extract_strided_slice %368 {offsets = [0, 0], sizes = [1, 32], strides = [1, 1]} : vector<2x32xf32> to vector<1x32xf32>
    %c0_80 = arith.constant 0 : index
    %370 = arith.index_cast %c6_i32 : i32 to index
    %c0_81 = arith.constant 0 : index
    %371 = vector.load %arg10[%c0_80, %370, %c0_81] : memref<2x8x32xf32, #tpu.memory_space<vmem>>, vector<1x1x32xf32>
    %372 = vector.shape_cast %371 : vector<1x1x32xf32> to vector<1x32xf32>
    %373 = vector.shape_cast %369 : vector<1x32xf32> to vector<1x1x32xf32>
    tpu.vector_store %arg10[%c0_80, %370, %c0_81], %373 {strides = array<i32>} : memref<2x8x32xf32, #tpu.memory_space<vmem>>, vector<1x1x32xf32>,
    %374 = vector.extract_strided_slice %368 {offsets = [1, 0], sizes = [1, 32], strides = [1, 1]} : vector<2x32xf32> to vector<1x32xf32>
    %c1_82 = arith.constant 1 : index
    %375 = arith.index_cast %c6_i32 : i32 to index
    %c0_83 = arith.constant 0 : index
    %376 = vector.load %arg10[%c1_82, %375, %c0_83] : memref<2x8x32xf32, #tpu.memory_space<vmem>>, vector<1x1x32xf32>
    %377 = vector.shape_cast %376 : vector<1x1x32xf32> to vector<1x32xf32>
    %378 = vector.shape_cast %374 : vector<1x32xf32> to vector<1x1x32xf32>
    tpu.vector_store %arg10[%c1_82, %375, %c0_83], %378 {strides = array<i32>} : memref<2x8x32xf32, #tpu.memory_space<vmem>>, vector<1x1x32xf32>,
    %c7_i32 = arith.constant 7 : i32
    %379 = arith.index_cast %c7_i32 : i32 to index
    %c0_84 = arith.constant 0 : index
    %c0_85 = arith.constant 0 : index
    %380 = vector.load %arg0[%379, %c0_84, %c0_85] : memref<8x2x8xf32, #tpu.memory_space<vmem>>, vector<1x2x8xf32>
    %381 = vector.shape_cast %380 : vector<1x2x8xf32> to vector<2x8xf32>
    %382 = tpu.concatenate %381, %361 in 1 : vector<2x8xf32>, vector<2x32xf32> -> vector<2x40xf32>
    %cst_86 = arith.constant dense<0.000000e+00> : vector<2x128xf32>
    %383 = tpu.matmul %382, %0, %cst_86 {dimension_numbers = #tpu.dot_dimension_numbers<[1], [0], [0], [1], [0, 0, 1, 1], [], []>} : vector<2x40xf32>, vector<40x128xf32>, vector<2x128xf32> -> vector<2x128xf32>
    %384 = arith.addf %383, %3 : vector<2x128xf32>
    %385 = vector.extract_strided_slice %384 {offsets = [0, 0], sizes = [2, 32], strides = [1, 1]} : vector<2x128xf32> to vector<2x32xf32>
    %386 = arith.negf %385 : vector<2x32xf32>
    %387 = math.exp %386 : vector<2x32xf32>
    %cst_87 = arith.constant 1.000000e+00 : f32
    %388 = vector.broadcast %cst_87 : f32 to vector<2x32xf32>
    %389 = arith.addf %388, %387 : vector<2x32xf32>
    %390 = arith.divf %388, %389 : vector<2x32xf32>
    %391 = vector.extract_strided_slice %384 {offsets = [0, 32], sizes = [2, 32], strides = [1, 1]} : vector<2x128xf32> to vector<2x32xf32>
    %392 = arith.negf %391 : vector<2x32xf32>
    %393 = math.exp %392 : vector<2x32xf32>
    %cst_88 = arith.constant 1.000000e+00 : f32
    %394 = vector.broadcast %cst_88 : f32 to vector<2x32xf32>
    %395 = arith.addf %394, %393 : vector<2x32xf32>
    %396 = arith.divf %394, %395 : vector<2x32xf32>
    %397 = vector.extract_strided_slice %384 {offsets = [0, 64], sizes = [2, 32], strides = [1, 1]} : vector<2x128xf32> to vector<2x32xf32>
    %398 = math.tanh %397 : vector<2x32xf32>
    %399 = vector.extract_strided_slice %384 {offsets = [0, 96], sizes = [2, 32], strides = [1, 1]} : vector<2x128xf32> to vector<2x32xf32>
    %400 = arith.negf %399 : vector<2x32xf32>
    %401 = math.exp %400 : vector<2x32xf32>
    %cst_89 = arith.constant 1.000000e+00 : f32
    %402 = vector.broadcast %cst_89 : f32 to vector<2x32xf32>
    %403 = arith.addf %402, %401 : vector<2x32xf32>
    %404 = arith.divf %402, %403 : vector<2x32xf32>
    %405 = arith.mulf %396, %364 : vector<2x32xf32>
    %406 = arith.mulf %390, %398 : vector<2x32xf32>
    %407 = arith.addf %405, %406 : vector<2x32xf32>
    %408 = math.tanh %407 : vector<2x32xf32>
    %409 = arith.mulf %404, %408 : vector<2x32xf32>
    %410 = vector.broadcast %c7_i32 : i32 to vector<2x1xi32>
    %411 = arith.cmpi slt, %410, %4 : vector<2x1xi32>
    %412 = vector.shape_cast %411 : vector<2x1xi1> to vector<2x1xi1>
    %413 = vector.broadcast %412 : vector<2x1xi1> to vector<2x32xi1>
    %414 = arith.select %413, %409, %361 : vector<2x32xi1>, vector<2x32xf32>
    %415 = vector.shape_cast %411 : vector<2x1xi1> to vector<2x1xi1>
    %416 = vector.broadcast %415 : vector<2x1xi1> to vector<2x32xi1>
    %417 = arith.select %416, %407, %364 : vector<2x32xi1>, vector<2x32xf32>
    %cst_90 = arith.constant 0.000000e+00 : f32
    %418 = vector.shape_cast %411 : vector<2x1xi1> to vector<2x1xi1>
    %419 = vector.broadcast %418 : vector<2x1xi1> to vector<2x32xi1>
    %420 = vector.broadcast %cst_90 : f32 to vector<2x32xf32>
    %421 = arith.select %419, %409, %420 : vector<2x32xi1>, vector<2x32xf32>
    %422 = vector.extract_strided_slice %421 {offsets = [0, 0], sizes = [1, 32], strides = [1, 1]} : vector<2x32xf32> to vector<1x32xf32>
    %c0_91 = arith.constant 0 : index
    %423 = arith.index_cast %c7_i32 : i32 to index
    %c0_92 = arith.constant 0 : index
    %424 = vector.load %arg10[%c0_91, %423, %c0_92] : memref<2x8x32xf32, #tpu.memory_space<vmem>>, vector<1x1x32xf32>
    %425 = vector.shape_cast %424 : vector<1x1x32xf32> to vector<1x32xf32>
    %426 = vector.shape_cast %422 : vector<1x32xf32> to vector<1x1x32xf32>
    tpu.vector_store %arg10[%c0_91, %423, %c0_92], %426 {strides = array<i32>} : memref<2x8x32xf32, #tpu.memory_space<vmem>>, vector<1x1x32xf32>,
    %427 = vector.extract_strided_slice %421 {offsets = [1, 0], sizes = [1, 32], strides = [1, 1]} : vector<2x32xf32> to vector<1x32xf32>
    %c1_93 = arith.constant 1 : index
    %428 = arith.index_cast %c7_i32 : i32 to index
    %c0_94 = arith.constant 0 : index
    %429 = vector.load %arg10[%c1_93, %428, %c0_94] : memref<2x8x32xf32, #tpu.memory_space<vmem>>, vector<1x1x32xf32>
    %430 = vector.shape_cast %429 : vector<1x1x32xf32> to vector<1x32xf32>
    %431 = vector.shape_cast %427 : vector<1x32xf32> to vector<1x1x32xf32>
    tpu.vector_store %arg10[%c1_93, %428, %c0_94], %431 {strides = array<i32>} : memref<2x8x32xf32, #tpu.memory_space<vmem>>, vector<1x1x32xf32>,
    %c8_i32 = arith.constant 8 : i32
    %c0_95 = arith.constant 0 : index
    %c0_96 = arith.constant 0 : index
    %c0_97 = arith.constant 0 : index
    %432 = vector.load %arg10[%c0_95, %c0_96, %c0_97] : memref<2x8x32xf32, #tpu.memory_space<vmem>>, vector<1x8x32xf32>
    %433 = vector.shape_cast %432 : vector<1x8x32xf32> to vector<8x32xf32>
    %434 = vector.extract_strided_slice %414 {offsets = [0, 0], sizes = [1, 32], strides = [1, 1]} : vector<2x32xf32> to vector<1x32xf32>
    %435 = vector.broadcast %434 : vector<1x32xf32> to vector<2x32xf32>
    %436 = arith.mulf %435, %5 : vector<2x32xf32>
    %437 = tpu.transpose %436, [1, 0] : vector<2x32xf32> -> vector<32x2xf32>
    %cst_98 = arith.constant dense<0.000000e+00> : vector<8x2xf32>
    %438 = tpu.matmul %433, %437, %cst_98 {dimension_numbers = #tpu.dot_dimension_numbers<[1], [0], [0], [1], [0, 0, 1, 1], [], []>} : vector<8x32xf32>, vector<32x2xf32>, vector<8x2xf32> -> vector<8x2xf32>
    %cst_99 = arith.constant dense<0xFF800000> : vector<2xf32>
    %439 = vector.multi_reduction <maximumf>, %438, %cst_99 [0] : vector<8x2xf32> to vector<2xf32>
    %cst_100 = arith.constant 0xFF800000 : f32
    %440 = vector.broadcast %cst_100 : f32 to vector<2xf32>
    %441 = arith.maximumf %440, %439 : vector<2xf32>
    %442 = vector.shape_cast %441 : vector<2xf32> to vector<1x2xf32>
    %443 = vector.broadcast %442 : vector<1x2xf32> to vector<8x2xf32>
    %444 = arith.subf %438, %443 : vector<8x2xf32>
    %445 = math.exp %444 : vector<8x2xf32>
    %cst_101 = arith.constant dense<0.000000e+00> : vector<2xf32>
    %446 = vector.multi_reduction <add>, %445, %cst_101 [0] : vector<8x2xf32> to vector<2xf32>
    %447 = vector.shape_cast %446 : vector<2xf32> to vector<1x2xf32>
    %448 = vector.broadcast %447 : vector<1x2xf32> to vector<8x2xf32>
    %449 = arith.divf %445, %448 : vector<8x2xf32>
    %450 = tpu.transpose %449, [1, 0] : vector<8x2xf32> -> vector<2x8xf32>
    %cst_102 = arith.constant dense<0.000000e+00> : vector<2x32xf32>
    %451 = tpu.matmul %450, %433, %cst_102 {dimension_numbers = #tpu.dot_dimension_numbers<[1], [0], [0], [1], [0, 0, 1, 1], [], []>} : vector<2x8xf32>, vector<8x32xf32>, vector<2x32xf32> -> vector<2x32xf32>
    %452 = arith.mulf %451, %5 : vector<2x32xf32>
    %cst_103 = arith.constant dense<0.000000e+00> : vector<32xf32>
    %453 = vector.multi_reduction <add>, %452, %cst_103 [0] : vector<2x32xf32> to vector<32xf32>
    %454 = vector.shape_cast %453 : vector<32xf32> to vector<1x32xf32>
    %cst_104 = arith.constant 5.000000e-01 : f32
    %455 = vector.broadcast %cst_104 : f32 to vector<1x32xf32>
    %456 = arith.mulf %454, %455 : vector<1x32xf32>
    %457 = tpu.concatenate %434, %456 in 1 : vector<1x32xf32>, vector<1x32xf32> -> vector<1x64xf32>
    %c1_105 = arith.constant 1 : index
    %c0_106 = arith.constant 0 : index
    %c0_107 = arith.constant 0 : index
    %458 = vector.load %arg10[%c1_105, %c0_106, %c0_107] : memref<2x8x32xf32, #tpu.memory_space<vmem>>, vector<1x8x32xf32>
    %459 = vector.shape_cast %458 : vector<1x8x32xf32> to vector<8x32xf32>
    %460 = vector.extract_strided_slice %414 {offsets = [1, 0], sizes = [1, 32], strides = [1, 1]} : vector<2x32xf32> to vector<1x32xf32>
    %461 = vector.broadcast %460 : vector<1x32xf32> to vector<2x32xf32>
    %462 = arith.mulf %461, %5 : vector<2x32xf32>
    %463 = tpu.transpose %462, [1, 0] : vector<2x32xf32> -> vector<32x2xf32>
    %cst_108 = arith.constant dense<0.000000e+00> : vector<8x2xf32>
    %464 = tpu.matmul %459, %463, %cst_108 {dimension_numbers = #tpu.dot_dimension_numbers<[1], [0], [0], [1], [0, 0, 1, 1], [], []>} : vector<8x32xf32>, vector<32x2xf32>, vector<8x2xf32> -> vector<8x2xf32>
    %cst_109 = arith.constant dense<0xFF800000> : vector<2xf32>
    %465 = vector.multi_reduction <maximumf>, %464, %cst_109 [0] : vector<8x2xf32> to vector<2xf32>
    %cst_110 = arith.constant 0xFF800000 : f32
    %466 = vector.broadcast %cst_110 : f32 to vector<2xf32>
    %467 = arith.maximumf %466, %465 : vector<2xf32>
    %468 = vector.shape_cast %467 : vector<2xf32> to vector<1x2xf32>
    %469 = vector.broadcast %468 : vector<1x2xf32> to vector<8x2xf32>
    %470 = arith.subf %464, %469 : vector<8x2xf32>
    %471 = math.exp %470 : vector<8x2xf32>
    %cst_111 = arith.constant dense<0.000000e+00> : vector<2xf32>
    %472 = vector.multi_reduction <add>, %471, %cst_111 [0] : vector<8x2xf32> to vector<2xf32>
    %473 = vector.shape_cast %472 : vector<2xf32> to vector<1x2xf32>
    %474 = vector.broadcast %473 : vector<1x2xf32> to vector<8x2xf32>
    %475 = arith.divf %471, %474 : vector<8x2xf32>
    %476 = tpu.transpose %475, [1, 0] : vector<8x2xf32> -> vector<2x8xf32>
    %cst_112 = arith.constant dense<0.000000e+00> : vector<2x32xf32>
    %477 = tpu.matmul %476, %459, %cst_112 {dimension_numbers = #tpu.dot_dimension_numbers<[1], [0], [0], [1], [0, 0, 1, 1], [], []>} : vector<2x8xf32>, vector<8x32xf32>, vector<2x32xf32> -> vector<2x32xf32>
    %478 = arith.mulf %477, %5 : vector<2x32xf32>
    %cst_113 = arith.constant dense<0.000000e+00> : vector<32xf32>
    %479 = vector.multi_reduction <add>, %478, %cst_113 [0] : vector<2x32xf32> to vector<32xf32>
    %480 = vector.shape_cast %479 : vector<32xf32> to vector<1x32xf32>
    %cst_114 = arith.constant 5.000000e-01 : f32
    %481 = vector.broadcast %cst_114 : f32 to vector<1x32xf32>
    %482 = arith.mulf %480, %481 : vector<1x32xf32>
    %483 = tpu.concatenate %460, %482 in 1 : vector<1x32xf32>, vector<1x32xf32> -> vector<1x64xf32>
    %484 = tpu.concatenate %457, %483 in 0 : vector<1x64xf32>, vector<1x64xf32> -> vector<2x64xf32>
    %c0_115 = arith.constant 0 : index
    %c0_116 = arith.constant 0 : index
    %485 = vector.load %arg5[%c0_115, %c0_116] : memref<64x32xf32, #tpu.memory_space<vmem>>, vector<64x32xf32>
    %cst_117 = arith.constant dense<0.000000e+00> : vector<2x32xf32>
    %486 = tpu.matmul %484, %485, %cst_117 {dimension_numbers = #tpu.dot_dimension_numbers<[1], [0], [0], [1], [0, 0, 1, 1], [], []>} : vector<2x64xf32>, vector<64x32xf32>, vector<2x32xf32> -> vector<2x32xf32>
    %c0_118 = arith.constant 0 : index
    %c0_119 = arith.constant 0 : index
    %487 = vector.load %arg6[%c0_118, %c0_119] : memref<1x32xf32, #tpu.memory_space<vmem>>, vector<1x32xf32>
    %488 = vector.broadcast %487 : vector<1x32xf32> to vector<2x32xf32>
    %489 = arith.addf %486, %488 : vector<2x32xf32>
    %c0_120 = arith.constant 0 : index
    %c0_121 = arith.constant 0 : index
    %490 = vector.load %arg7[%c0_120, %c0_121] : memref<32x2xf32, #tpu.memory_space<vmem>>, vector<32x2xf32>
    %cst_122 = arith.constant dense<0.000000e+00> : vector<2x2xf32>
    %491 = tpu.matmul %489, %490, %cst_122 {dimension_numbers = #tpu.dot_dimension_numbers<[1], [0], [0], [1], [0, 0, 1, 1], [], []>} : vector<2x32xf32>, vector<32x2xf32>, vector<2x2xf32> -> vector<2x2xf32>
    %c0_123 = arith.constant 0 : index
    %c0_124 = arith.constant 0 : index
    %492 = vector.load %arg8[%c0_123, %c0_124] : memref<1x2xf32, #tpu.memory_space<vmem>>, vector<1x2xf32>
    %493 = vector.broadcast %492 : vector<1x2xf32> to vector<2x2xf32>
    %494 = arith.addf %491, %493 : vector<2x2xf32>
    %c0_125 = arith.constant 0 : index
    %c0_126 = arith.constant 0 : index
    %495 = vector.load %arg9[%c0_125, %c0_126] : memref<2x2xf32, #tpu.memory_space<vmem>>, vector<2x2xf32>
    tpu.vector_store %arg9[%c0_125, %c0_126], %494 {strides = array<i32>} : memref<2x2xf32, #tpu.memory_space<vmem>>, vector<2x2xf32>,
    return
  }
}

</mosaic_0001>

<llo_original>
// kernel: tpu_custom_call.1
$region0: #{tpu_custom_call.1}
  #allocation0 [shape = 'u32[]', space=smem, size = 0x4, offset = 0x4, fixed_abs, tag = 'smem constant byte address 0x4 - core index']
  #allocation1 [shape = 'u32[72,128]{1,0:T(1,128)}', space=vmem, size = 0x9000, scoped, tag = 'internal scratch']
  #allocation2 [shape = 'f32[2,8,32]{2,1,0:T(8,128)}', space=vmem, size = 0x2000, scoped, tag = 'scratch operand']
  %s0 = inlined_call_operand.vmem [shape: f32[8,2,8], index: 0, kind: input, shape index: {}]
  %s1 = inlined_call_operand.vmem [shape: s32[2,1], index: 1, kind: input, shape index: {}]
  %s2 = inlined_call_operand.vmem [shape: f32[40,128], index: 2, kind: input, shape index: {}]
  %s3 = inlined_call_operand.vmem [shape: f32[1,128], index: 3, kind: input, shape index: {}]
  %s4 = inlined_call_operand.vmem [shape: f32[2,32], index: 4, kind: input, shape index: {}]
  %s5 = inlined_call_operand.vmem [shape: f32[64,32], index: 5, kind: input, shape index: {}]
  %s6 = inlined_call_operand.vmem [shape: f32[1,32], index: 6, kind: input, shape index: {}]
  %s7 = inlined_call_operand.vmem [shape: f32[32,2], index: 7, kind: input, shape index: {}]
  %s8 = inlined_call_operand.vmem [shape: f32[1,2], index: 8, kind: input, shape index: {}]
  %s9 = inlined_call_operand.hbm [shape: f32[2,2], index: 9, kind: output, shape index: {}]
  %s10 = sld [smem:[#allocation0]]
  $region46: #{tpu_custom_call.1} parent=0
    _
  %s12 = ssub.s32 1, %s10
  %s13 = scalar_select 0, %s12, %s10
  $region1: #{tpu_custom_call.1} parent=0
    #allocation3 [shape = 'u8[1024]{0}', space=vmem, size = 0x400, scoped, tag = 'output window, operand 0, single buffered']
    #allocation4 [shape = 's32[1]{0}', space=sflag, size = 0x4, scoped, tag = 'scoped memory for tpu_custom_call.1']
    %14 = vsyncpa [#allocation4], 0
    // Predicated region
    $region2: #{tpu_custom_call.1} parent=1 // pred_check
      _
    $region3: #{tpu_custom_call.1} parent=1 // pred_check_branch
      %16 = sbr.rel (0) target = $region5
    $region4: #{tpu_custom_call.1} parent=1 // pred_region
      _
    $region5: #{tpu_custom_call.1} parent=1 // pred_fallthru
      _
    // Predicated region
    $region6: #{tpu_custom_call.1} parent=1 // pred_check
      _
    $region7: #{tpu_custom_call.1} parent=1 // pred_check_branch
      %18 = sbr.rel (0) target = $region9
    $region8: #{tpu_custom_call.1} parent=1 // pred_region
      _
    $region9: #{tpu_custom_call.1} parent=1 // pred_fallthru
      _
    // Predicated region
    $region10: #{tpu_custom_call.1} parent=1 // pred_check
      _
    $region11: #{tpu_custom_call.1} parent=1 // pred_check_branch
      %20 = sbr.rel (0) target = $region13
    $region12: #{tpu_custom_call.1} parent=1 // pred_region
      _
    $region13: #{tpu_custom_call.1} parent=1 // pred_fallthru
      _
    // Predicated region
    $region14: #{tpu_custom_call.1} parent=1 // pred_check
      _
    $region15: #{tpu_custom_call.1} parent=1 // pred_check_branch
      %22 = sbr.rel (0) target = $region17
    $region16: #{tpu_custom_call.1} parent=1 // pred_region
      _
    $region17: #{tpu_custom_call.1} parent=1 // pred_fallthru
      _
    // Predicated region
    $region18: #{tpu_custom_call.1} parent=1 // pred_check
      _
    $region19: #{tpu_custom_call.1} parent=1 // pred_check_branch
      %24 = sbr.rel (0) target = $region21
    $region20: #{tpu_custom_call.1} parent=1 // pred_region
      _
    $region21: #{tpu_custom_call.1} parent=1 // pred_fallthru
      _
    // Predicated region
    $region22: #{tpu_custom_call.1} parent=1 // pred_check
      _
    $region23: #{tpu_custom_call.1} parent=1 // pred_check_branch
      %26 = sbr.rel (0) target = $region25
    $region24: #{tpu_custom_call.1} parent=1 // pred_region
      _
    $region25: #{tpu_custom_call.1} parent=1 // pred_fallthru
      _
    // Predicated region
    $region26: #{tpu_custom_call.1} parent=1 // pred_check
      _
    $region27: #{tpu_custom_call.1} parent=1 // pred_check_branch
      %28 = sbr.rel (0) target = $region29
    $region28: #{tpu_custom_call.1} parent=1 // pred_region
      _
    $region29: #{tpu_custom_call.1} parent=1 // pred_fallthru
      _
    // Predicated region
    $region30: #{tpu_custom_call.1} parent=1 // pred_check
      _
    $region31: #{tpu_custom_call.1} parent=1 // pred_check_branch
      %30 = sbr.rel (0) target = $region33
    $region32: #{tpu_custom_call.1} parent=1 // pred_region
      _
    $region33: #{tpu_custom_call.1} parent=1 // pred_fallthru
      _
    // Predicated region
    $region34: #{tpu_custom_call.1} parent=1 // pred_check
      _
    $region35: #{tpu_custom_call.1} parent=1 // pred_check_branch
      %32 = sbr.rel (0) target = $region37
    $region36: #{tpu_custom_call.1} parent=1 // pred_region
      _
    $region37: #{tpu_custom_call.1} parent=1 // pred_fallthru
      _
    %v33 = vld [vmem:[%s2] sm:$0xff]
    %v34 = vld [vmem:[%s2 + $0x8] sm:$0xff]
    %v35 = vld [vmem:[%s2 + $0x10] sm:$0xff]
    %v36 = vld [vmem:[%s2 + $0x18] sm:$0xff]
    %v37 = vld [vmem:[%s2 + $0x20] sm:$0xff]
    %v38 = vld [vmem:[%s3] sm:$0x1]
    %v40 = vperm.slane %v38, 0
    %v42 = vld [vmem:[%s1] sm:$0x3]
    %v43 = vld [vmem:[%s4] sm:$0x3]
    %v44 = vld [vmem:[%s0] sm:$0x3]
    %vm45 = vcmask 64512
    %v46 = vsel %vm45, %v44, 0.0
    %vm47 = vcmask 326656
    %v49 = vsel %vm47, %v46, 0
    %51 = vmatpush.msra.mxu0 0.0
    %52 = vmatpush.msra.mxu0 0.0
    %53 = vmatpush.msra.mxu0 0.0
    %54 = vmatpush.msra.mxu0 0.0
    %55 = vmatpush.msra.mxu0 0.0
    %56 = vmatpush.msra.mxu0 0.0
    %57 = vmatpush.msra.mxu0 0.0
    %58 = vmatpush.msra.mxu0 0.0
    %59 = vmatpush.msra.mxu0 0.0
    %60 = vmatpush.msra.mxu0 0.0
    %61 = vmatpush.msra.mxu0 0.0
    %62 = vmatpush.msra.mxu0 %v37
    %63 = vmatpush.msra.mxu0 %v36
    %64 = vmatpush.msra.mxu0 %v35
    %65 = vmatpush.msra.mxu0 %v34
    %66 = vmatpush.msra.mxu0 %v33
    %67 = vmatmul.f32.gmra.mxu0 %v49
    %v68 = vpop.f32.mrf.mxu0
    %v69 = vadd.f32 %v40, %v68
    %70 = vdwg.mxu0
    %v71 = vxor.u32 %v69, 2147483648
    %v72 = vmul.f32 %v71, 1.442695
    %v73 = vpow.pop %v72
    %v74 = vadd.f32 %v73, 1.0
    %v75 = vrcp.pop %v74
    %v76 = vmul.f32 %v74, %v75
    %v77 = vsub.f32 1.0, %v76
    %v78 = vmul.f32 %v75, %v77
    %v79 = vadd.f32 %v75, %v78
    %vm80 = vweird.f32 %v74
    %vm81 = vweird.f32 %v75
    %vm82 = vmor %vm80, %vm81
    %v83 = vsel %vm82, %v75, %v79
    %v84 = vand.u32 2147483647, %v74
    %vm85 = vcmp.eq.f32.partialorder %v84, 8.507059e+37
    %v86 = vand.u32 %v74, 2147483648
    %v87 = vor.u32 1.1754944e-38, %v86
    %v88 = vsel %vm85, %v87, %v83
    %v89 = vmul.f32 1.0, %v88
    %v90 = vtanh.pop %v69
    %v91 = vmul.f32 %v89, 0.0
    %93 = vrot.lane.b32.xlu0 %v90, 64
    %v94 = vpop.permute.xlu0 %93
    %v96 = vmul.f32 %v89, %v94
    %98 = vrot.lane.b32.xlu0 %v96, 32
    %v99 = vpop.permute.xlu0 %98
    %v101 = vadd.f32 %v91, %v99
    %v102 = vtanh.pop %v101
    %104 = vrot.lane.b32.xlu0 %v102, 64
    %v105 = vpop.permute.xlu0 %104
    %v107 = vmul.f32 %v89, %v105
    %vm108 = vcmp.gt.s32.totalorder %v42, 0
    %v109 = vsel %vm108, 1, 0
    %110 = vset.pattern.permute.xlu0 0
    %111 = vperm.xlu0 %110, %v109
    %v112 = vpop.permute.xlu0 %111
    %vm113 = vcmp.eq.s32.totalorder %v112, 1
    %v114 = vsel %vm113, %v107, 0.0
    %v115 = vsel %vm113, %v101, 0.0
    %117 = vrot.lane.b32.xlu0 %v114, 32
    %v118 = vpop.permute.xlu0 %117
    %vm120 = vcmask 253952
    %121 = vst.msk [vmem:[#allocation2] sm:$0x1] %vm120, %v118
    %s122 = scalar_lea.vmem [#allocation2], 8
    %vm123 = vcmask 254977
    %124 = vst.msk [vmem:[%s122 - $0x1] sm:$0x2] %vm123, %v118
    %s125 = scalar_lea.vmem %s0, 2
    %v126 = vld [vmem:[%s125] sm:$0x3]
    %127 = vrot.lane.b32.xlu0 %v114, 40
    %v128 = vpop.permute.xlu0 %127
    %v130 = vsel %vm45, %v126, %v128
    %v132 = vsel %vm47, %v130, 0
    %134 = vmatpush.msra.mxu0 0.0
    %135 = vmatpush.msra.mxu0 0.0
    %136 = vmatpush.msra.mxu0 0.0
    %137 = vmatpush.msra.mxu0 0.0
    %138 = vmatpush.msra.mxu0 0.0
    %139 = vmatpush.msra.mxu0 0.0
    %140 = vmatpush.msra.mxu0 0.0
    %141 = vmatpush.msra.mxu0 0.0
    %142 = vmatpush.msra.mxu0 0.0
    %143 = vmatpush.msra.mxu0 0.0
    %144 = vmatpush.msra.mxu0 0.0
    %145 = vmatpush.msra.mxu0 %v37
    %146 = vmatpush.msra.mxu0 %v36
    %147 = vmatpush.msra.mxu0 %v35
    %148 = vmatpush.msra.mxu0 %v34
    %149 = vmatpush.msra.mxu0 %v33
    %150 = vmatmul.f32.gmra.mxu0 %v132
    %v151 = vpop.f32.mrf.mxu0
    %v152 = vadd.f32 %v40, %v151
    %153 = vdwg.mxu0
    %v154 = vxor.u32 %v152, 2147483648
    %v155 = vmul.f32 %v154, 1.442695
    %v156 = vpow.pop %v155
    %v157 = vadd.f32 %v156, 1.0
    %v158 = vrcp.pop %v157
    %v159 = vmul.f32 %v157, %v158
    %v160 = vsub.f32 1.0, %v159
    %v161 = vmul.f32 %v158, %v160
    %v162 = vadd.f32 %v158, %v161
    %vm163 = vweird.f32 %v157
    %vm164 = vweird.f32 %v158
    %vm165 = vmor %vm163, %vm164
    %v166 = vsel %vm165, %v158, %v162
    %v167 = vand.u32 2147483647, %v157
    %vm168 = vcmp.eq.f32.partialorder %v167, 8.507059e+37
    %v169 = vand.u32 %v157, 2147483648
    %v170 = vor.u32 1.1754944e-38, %v169
    %v171 = vsel %vm168, %v170, %v166
    %v172 = vmul.f32 1.0, %v171
    %v173 = vtanh.pop %v152
    %v174 = vmul.f32 %v172, %v115
    %176 = vrot.lane.b32.xlu0 %v173, 64
    %v177 = vpop.permute.xlu0 %176
    %v179 = vmul.f32 %v172, %v177
    %181 = vrot.lane.b32.xlu0 %v179, 32
    %v182 = vpop.permute.xlu0 %181
    %v184 = vadd.f32 %v174, %v182
    %v185 = vtanh.pop %v184
    %187 = vrot.lane.b32.xlu0 %v185, 64
    %v188 = vpop.permute.xlu0 %187
    %v190 = vmul.f32 %v172, %v188
    %vm191 = vcmp.gt.s32.totalorder %v42, 1
    %v192 = vsel %vm191, 1, 0
    %193 = vset.pattern.permute.xlu0 0
    %194 = vperm.xlu0 %193, %v192
    %v195 = vpop.permute.xlu0 %194
    %vm196 = vcmp.eq.s32.totalorder %v195, 1
    %v197 = vsel %vm196, %v190, %v114
    %v198 = vsel %vm196, %v184, %v115
    %v199 = vsel %vm196, %v190, 0.0
    %201 = vrot.lane.b32.xlu0 %v199, 32
    %v202 = vpop.permute.xlu0 %201
    %204 = vst.msk [vmem:[#allocation2 + $0x1] sm:$0x1] %vm120, %v202
    %205 = vst.msk [vmem:[%s122] sm:$0x2] %vm123, %v202
    %s206 = scalar_lea.vmem %s0, 4
    %v207 = vld [vmem:[%s206] sm:$0x3]
    %209 = vrot.lane.b32.xlu0 %v197, 40
    %v210 = vpop.permute.xlu0 %209
    %v212 = vsel %vm45, %v207, %v210
    %v214 = vsel %vm47, %v212, 0
    %216 = vmatpush.msra.mxu0 0.0
    %217 = vmatpush.msra.mxu0 0.0
    %218 = vmatpush.msra.mxu0 0.0
    %219 = vmatpush.msra.mxu0 0.0
    %220 = vmatpush.msra.mxu0 0.0
    %221 = vmatpush.msra.mxu0 0.0
    %222 = vmatpush.msra.mxu0 0.0
    %223 = vmatpush.msra.mxu0 0.0
    %224 = vmatpush.msra.mxu0 0.0
    %225 = vmatpush.msra.mxu0 0.0
    %226 = vmatpush.msra.mxu0 0.0
    %227 = vmatpush.msra.mxu0 %v37
    %228 = vmatpush.msra.mxu0 %v36
    %229 = vmatpush.msra.mxu0 %v35
    %230 = vmatpush.msra.mxu0 %v34
    %231 = vmatpush.msra.mxu0 %v33
    %232 = vmatmul.f32.gmra.mxu0 %v214
    %v233 = vpop.f32.mrf.mxu0
    %v234 = vadd.f32 %v40, %v233
    %235 = vdwg.mxu0
    %v236 = vxor.u32 %v234, 2147483648
    %v237 = vmul.f32 %v236, 1.442695
    %v238 = vpow.pop %v237
    %v239 = vadd.f32 %v238, 1.0
    %v240 = vrcp.pop %v239
    %v241 = vmul.f32 %v239, %v240
    %v242 = vsub.f32 1.0, %v241
    %v243 = vmul.f32 %v240, %v242
    %v244 = vadd.f32 %v240, %v243
    %vm245 = vweird.f32 %v239
    %vm246 = vweird.f32 %v240
    %vm247 = vmor %vm245, %vm246
    %v248 = vsel %vm247, %v240, %v244
    %v249 = vand.u32 2147483647, %v239
    %vm250 = vcmp.eq.f32.partialorder %v249, 8.507059e+37
    %v251 = vand.u32 %v239, 2147483648
    %v252 = vor.u32 1.1754944e-38, %v251
    %v253 = vsel %vm250, %v252, %v248
    %v254 = vmul.f32 1.0, %v253
    %v255 = vtanh.pop %v234
    %v256 = vmul.f32 %v254, %v198
    %258 = vrot.lane.b32.xlu0 %v255, 64
    %v259 = vpop.permute.xlu0 %258
    %v261 = vmul.f32 %v254, %v259
    %263 = vrot.lane.b32.xlu0 %v261, 32
    %v264 = vpop.permute.xlu0 %263
    %v266 = vadd.f32 %v256, %v264
    %v267 = vtanh.pop %v266
    %269 = vrot.lane.b32.xlu0 %v267, 64
    %v270 = vpop.permute.xlu0 %269
    %v272 = vmul.f32 %v254, %v270
    %vm273 = vcmp.gt.s32.totalorder %v42, 2
    %v274 = vsel %vm273, 1, 0
    %275 = vset.pattern.permute.xlu0 0
    %276 = vperm.xlu0 %275, %v274
    %v277 = vpop.permute.xlu0 %276
    %vm278 = vcmp.eq.s32.totalorder %v277, 1
    %v279 = vsel %vm278, %v272, %v197
    %v280 = vsel %vm278, %v266, %v198
    %v281 = vsel %vm278, %v272, 0.0
    %283 = vrot.lane.b32.xlu0 %v281, 32
    %v284 = vpop.permute.xlu0 %283
    %286 = vst.msk [vmem:[#allocation2 + $0x2] sm:$0x1] %vm120, %v284
    %287 = vst.msk [vmem:[%s122 + $0x1] sm:$0x2] %vm123, %v284
    %s288 = scalar_lea.vmem %s0, 6
    %v289 = vld [vmem:[%s288] sm:$0x3]
    %291 = vrot.lane.b32.xlu0 %v279, 40
    %v292 = vpop.permute.xlu0 %291
    %v294 = vsel %vm45, %v289, %v292
    %v296 = vsel %vm47, %v294, 0
    %298 = vmatpush.msra.mxu0 0.0
    %299 = vmatpush.msra.mxu0 0.0
    %300 = vmatpush.msra.mxu0 0.0
    %301 = vmatpush.msra.mxu0 0.0
    %302 = vmatpush.msra.mxu0 0.0
    %303 = vmatpush.msra.mxu0 0.0
    %304 = vmatpush.msra.mxu0 0.0
    %305 = vmatpush.msra.mxu0 0.0
    %306 = vmatpush.msra.mxu0 0.0
    %307 = vmatpush.msra.mxu0 0.0
    %308 = vmatpush.msra.mxu0 0.0
    %309 = vmatpush.msra.mxu0 %v37
    %310 = vmatpush.msra.mxu0 %v36
    %311 = vmatpush.msra.mxu0 %v35
    %312 = vmatpush.msra.mxu0 %v34
    %313 = vmatpush.msra.mxu0 %v33
    %314 = vmatmul.f32.gmra.mxu0 %v296
    %v315 = vpop.f32.mrf.mxu0
    %v316 = vadd.f32 %v40, %v315
    %317 = vdwg.mxu0
    %v318 = vxor.u32 %v316, 2147483648
    %v319 = vmul.f32 %v318, 1.442695
    %v320 = vpow.pop %v319
    %v321 = vadd.f32 %v320, 1.0
    %v322 = vrcp.pop %v321
    %v323 = vmul.f32 %v321, %v322
    %v324 = vsub.f32 1.0, %v323
    %v325 = vmul.f32 %v322, %v324
    %v326 = vadd.f32 %v322, %v325
    %vm327 = vweird.f32 %v321
    %vm328 = vweird.f32 %v322
    %vm329 = vmor %vm327, %vm328
    %v330 = vsel %vm329, %v322, %v326
    %v331 = vand.u32 2147483647, %v321
    %vm332 = vcmp.eq.f32.partialorder %v331, 8.507059e+37
    %v333 = vand.u32 %v321, 2147483648
    %v334 = vor.u32 1.1754944e-38, %v333
    %v335 = vsel %vm332, %v334, %v330
    %v336 = vmul.f32 1.0, %v335
    %v337 = vtanh.pop %v316
    %v338 = vmul.f32 %v336, %v280
    %340 = vrot.lane.b32.xlu0 %v337, 64
    %v341 = vpop.permute.xlu0 %340
    %v343 = vmul.f32 %v336, %v341
    %345 = vrot.lane.b32.xlu0 %v343, 32
    %v346 = vpop.permute.xlu0 %345
    %v348 = vadd.f32 %v338, %v346
    %v349 = vtanh.pop %v348
    %351 = vrot.lane.b32.xlu0 %v349, 64
    %v352 = vpop.permute.xlu0 %351
    %v354 = vmul.f32 %v336, %v352
    %vm355 = vcmp.gt.s32.totalorder %v42, 3
    %v356 = vsel %vm355, 1, 0
    %357 = vset.pattern.permute.xlu0 0
    %358 = vperm.xlu0 %357, %v356
    %v359 = vpop.permute.xlu0 %358
    %vm360 = vcmp.eq.s32.totalorder %v359, 1
    %v361 = vsel %vm360, %v354, %v279
    %v362 = vsel %vm360, %v348, %v280
    %v363 = vsel %vm360, %v354, 0.0
    %365 = vrot.lane.b32.xlu0 %v363, 32
    %v366 = vpop.permute.xlu0 %365
    %368 = vst.msk [vmem:[#allocation2 + $0x3] sm:$0x1] %vm120, %v366
    %369 = vst.msk [vmem:[%s122 + $0x2] sm:$0x2] %vm123, %v366
    %s370 = scalar_lea.vmem %s0, 8
    %v371 = vld [vmem:[%s370] sm:$0x3]
    %373 = vrot.lane.b32.xlu0 %v361, 40
    %v374 = vpop.permute.xlu0 %373
    %v376 = vsel %vm45, %v371, %v374
    %v378 = vsel %vm47, %v376, 0
    %380 = vmatpush.msra.mxu0 0.0
    %381 = vmatpush.msra.mxu0 0.0
    %382 = vmatpush.msra.mxu0 0.0
    %383 = vmatpush.msra.mxu0 0.0
    %384 = vmatpush.msra.mxu0 0.0
    %385 = vmatpush.msra.mxu0 0.0
    %386 = vmatpush.msra.mxu0 0.0
    %387 = vmatpush.msra.mxu0 0.0
    %388 = vmatpush.msra.mxu0 0.0
    %389 = vmatpush.msra.mxu0 0.0
    %390 = vmatpush.msra.mxu0 0.0
    %391 = vmatpush.msra.mxu0 %v37
    %392 = vmatpush.msra.mxu0 %v36
    %393 = vmatpush.msra.mxu0 %v35
    %394 = vmatpush.msra.mxu0 %v34
    %395 = vmatpush.msra.mxu0 %v33
    %396 = vmatmul.f32.gmra.mxu0 %v378
    %v397 = vpop.f32.mrf.mxu0
    %v398 = vadd.f32 %v40, %v397
    %399 = vdwg.mxu0
    %v400 = vxor.u32 %v398, 2147483648
    %v401 = vmul.f32 %v400, 1.442695
    %v402 = vpow.pop %v401
    %v403 = vadd.f32 %v402, 1.0
    %v404 = vrcp.pop %v403
    %v405 = vmul.f32 %v403, %v404
    %v406 = vsub.f32 1.0, %v405
    %v407 = vmul.f32 %v404, %v406
    %v408 = vadd.f32 %v404, %v407
    %vm409 = vweird.f32 %v403
    %vm410 = vweird.f32 %v404
    %vm411 = vmor %vm409, %vm410
    %v412 = vsel %vm411, %v404, %v408
    %v413 = vand.u32 2147483647, %v403
    %vm414 = vcmp.eq.f32.partialorder %v413, 8.507059e+37
    %v415 = vand.u32 %v403, 2147483648
    %v416 = vor.u32 1.1754944e-38, %v415
    %v417 = vsel %vm414, %v416, %v412
    %v418 = vmul.f32 1.0, %v417
    %v419 = vtanh.pop %v398
    %v420 = vmul.f32 %v418, %v362
    %422 = vrot.lane.b32.xlu0 %v419, 64
    %v423 = vpop.permute.xlu0 %422
    %v425 = vmul.f32 %v418, %v423
    %427 = vrot.lane.b32.xlu0 %v425, 32
    %v428 = vpop.permute.xlu0 %427
    %v430 = vadd.f32 %v420, %v428
    %v431 = vtanh.pop %v430
    %433 = vrot.lane.b32.xlu0 %v431, 64
    %v434 = vpop.permute.xlu0 %433
    %v436 = vmul.f32 %v418, %v434
    %vm437 = vcmp.gt.s32.totalorder %v42, 4
    %v438 = vsel %vm437, 1, 0
    %439 = vset.pattern.permute.xlu0 0
    %440 = vperm.xlu0 %439, %v438
    %v441 = vpop.permute.xlu0 %440
    %vm442 = vcmp.eq.s32.totalorder %v441, 1
    %v443 = vsel %vm442, %v436, %v361
    %v444 = vsel %vm442, %v430, %v362
    %v445 = vsel %vm442, %v436, 0.0
    %447 = vrot.lane.b32.xlu0 %v445, 32
    %v448 = vpop.permute.xlu0 %447
    %450 = vst.msk [vmem:[#allocation2 + $0x4] sm:$0x1] %vm120, %v448
    %451 = vst.msk [vmem:[%s122 + $0x3] sm:$0x2] %vm123, %v448
    %s452 = scalar_lea.vmem %s0, 10
    %v453 = vld [vmem:[%s452] sm:$0x3]
    %455 = vrot.lane.b32.xlu0 %v443, 40
    %v456 = vpop.permute.xlu0 %455
    %v458 = vsel %vm45, %v453, %v456
    %v460 = vsel %vm47, %v458, 0
    %462 = vmatpush.msra.mxu0 0.0
    %463 = vmatpush.msra.mxu0 0.0
    %464 = vmatpush.msra.mxu0 0.0
    %465 = vmatpush.msra.mxu0 0.0
    %466 = vmatpush.msra.mxu0 0.0
    %467 = vmatpush.msra.mxu0 0.0
    %468 = vmatpush.msra.mxu0 0.0
    %469 = vmatpush.msra.mxu0 0.0
    %470 = vmatpush.msra.mxu0 0.0
    %471 = vmatpush.msra.mxu0 0.0
    %472 = vmatpush.msra.mxu0 0.0
    %473 = vmatpush.msra.mxu0 %v37
    %474 = vmatpush.msra.mxu0 %v36
    %475 = vmatpush.msra.mxu0 %v35
    %476 = vmatpush.msra.mxu0 %v34
    %477 = vmatpush.msra.mxu0 %v33
    %478 = vmatmul.f32.gmra.mxu0 %v460
    %v479 = vpop.f32.mrf.mxu0
    %v480 = vadd.f32 %v40, %v479
    %481 = vdwg.mxu0
    %v482 = vxor.u32 %v480, 2147483648
    %v483 = vmul.f32 %v482, 1.442695
    %v484 = vpow.pop %v483
    %v485 = vadd.f32 %v484, 1.0
    %v486 = vrcp.pop %v485
    %v487 = vmul.f32 %v485, %v486
    %v488 = vsub.f32 1.0, %v487
    %v489 = vmul.f32 %v486, %v488
    %v490 = vadd.f32 %v486, %v489
    %vm491 = vweird.f32 %v485
    %vm492 = vweird.f32 %v486
    %vm493 = vmor %vm491, %vm492
    %v494 = vsel %vm493, %v486, %v490
    %v495 = vand.u32 2147483647, %v485
    %vm496 = vcmp.eq.f32.partialorder %v495, 8.507059e+37
    %v497 = vand.u32 %v485, 2147483648
    %v498 = vor.u32 1.1754944e-38, %v497
    %v499 = vsel %vm496, %v498, %v494
    %v500 = vmul.f32 1.0, %v499
    %v501 = vtanh.pop %v480
    %v502 = vmul.f32 %v500, %v444
    %504 = vrot.lane.b32.xlu0 %v501, 64
    %v505 = vpop.permute.xlu0 %504
    %v507 = vmul.f32 %v500, %v505
    %509 = vrot.lane.b32.xlu0 %v507, 32
    %v510 = vpop.permute.xlu0 %509
    %v512 = vadd.f32 %v502, %v510
    %v513 = vtanh.pop %v512
    %515 = vrot.lane.b32.xlu0 %v513, 64
    %v516 = vpop.permute.xlu0 %515
    %v518 = vmul.f32 %v500, %v516
    %vm519 = vcmp.gt.s32.totalorder %v42, 5
    %v520 = vsel %vm519, 1, 0
    %521 = vset.pattern.permute.xlu0 0
    %522 = vperm.xlu0 %521, %v520
    %v523 = vpop.permute.xlu0 %522
    %vm524 = vcmp.eq.s32.totalorder %v523, 1
    %v525 = vsel %vm524, %v518, %v443
    %v526 = vsel %vm524, %v512, %v444
    %v527 = vsel %vm524, %v518, 0.0
    %529 = vrot.lane.b32.xlu0 %v527, 32
    %v530 = vpop.permute.xlu0 %529
    %532 = vst.msk [vmem:[#allocation2 + $0x5] sm:$0x1] %vm120, %v530
    %533 = vst.msk [vmem:[%s122 + $0x4] sm:$0x2] %vm123, %v530
    %s534 = scalar_lea.vmem %s0, 12
    %v535 = vld [vmem:[%s534] sm:$0x3]
    %537 = vrot.lane.b32.xlu0 %v525, 40
    %v538 = vpop.permute.xlu0 %537
    %v540 = vsel %vm45, %v535, %v538
    %v542 = vsel %vm47, %v540, 0
    %544 = vmatpush.msra.mxu0 0.0
    %545 = vmatpush.msra.mxu0 0.0
    %546 = vmatpush.msra.mxu0 0.0
    %547 = vmatpush.msra.mxu0 0.0
    %548 = vmatpush.msra.mxu0 0.0
    %549 = vmatpush.msra.mxu0 0.0
    %550 = vmatpush.msra.mxu0 0.0
    %551 = vmatpush.msra.mxu0 0.0
    %552 = vmatpush.msra.mxu0 0.0
    %553 = vmatpush.msra.mxu0 0.0
    %554 = vmatpush.msra.mxu0 0.0
    %555 = vmatpush.msra.mxu0 %v37
    %556 = vmatpush.msra.mxu0 %v36
    %557 = vmatpush.msra.mxu0 %v35
    %558 = vmatpush.msra.mxu0 %v34
    %559 = vmatpush.msra.mxu0 %v33
    %560 = vmatmul.f32.gmra.mxu0 %v542
    %v561 = vpop.f32.mrf.mxu0
    %v562 = vadd.f32 %v40, %v561
    %563 = vdwg.mxu0
    %v564 = vxor.u32 %v562, 2147483648
    %v565 = vmul.f32 %v564, 1.442695
    %v566 = vpow.pop %v565
    %v567 = vadd.f32 %v566, 1.0
    %v568 = vrcp.pop %v567
    %v569 = vmul.f32 %v567, %v568
    %v570 = vsub.f32 1.0, %v569
    %v571 = vmul.f32 %v568, %v570
    %v572 = vadd.f32 %v568, %v571
    %vm573 = vweird.f32 %v567
    %vm574 = vweird.f32 %v568
    %vm575 = vmor %vm573, %vm574
    %v576 = vsel %vm575, %v568, %v572
    %v577 = vand.u32 2147483647, %v567
    %vm578 = vcmp.eq.f32.partialorder %v577, 8.507059e+37
    %v579 = vand.u32 %v567, 2147483648
    %v580 = vor.u32 1.1754944e-38, %v579
    %v581 = vsel %vm578, %v580, %v576
    %v582 = vmul.f32 1.0, %v581
    %v583 = vtanh.pop %v562
    %v584 = vmul.f32 %v582, %v526
    %586 = vrot.lane.b32.xlu0 %v583, 64
    %v587 = vpop.permute.xlu0 %586
    %v589 = vmul.f32 %v582, %v587
    %591 = vrot.lane.b32.xlu0 %v589, 32
    %v592 = vpop.permute.xlu0 %591
    %v594 = vadd.f32 %v584, %v592
    %v595 = vtanh.pop %v594
    %597 = vrot.lane.b32.xlu0 %v595, 64
    %v598 = vpop.permute.xlu0 %597
    %v600 = vmul.f32 %v582, %v598
    %vm601 = vcmp.gt.s32.totalorder %v42, 6
    %v602 = vsel %vm601, 1, 0
    %603 = vset.pattern.permute.xlu0 0
    %604 = vperm.xlu0 %603, %v602
    %v605 = vpop.permute.xlu0 %604
    %vm606 = vcmp.eq.s32.totalorder %v605, 1
    %v607 = vsel %vm606, %v600, %v525
    %v608 = vsel %vm606, %v594, %v526
    %v609 = vsel %vm606, %v600, 0.0
    %611 = vrot.lane.b32.xlu0 %v609, 32
    %v612 = vpop.permute.xlu0 %611
    %614 = vst.msk [vmem:[#allocation2 + $0x6] sm:$0x1] %vm120, %v612
    %615 = vst.msk [vmem:[%s122 + $0x5] sm:$0x2] %vm123, %v612
    %s616 = scalar_lea.vmem %s0, 14
    %v617 = vld [vmem:[%s616] sm:$0x3]
    %619 = vrot.lane.b32.xlu0 %v607, 40
    %v620 = vpop.permute.xlu0 %619
    %v622 = vsel %vm45, %v617, %v620
    %v624 = vsel %vm47, %v622, 0
    %626 = vmatpush.msra.mxu0 0.0
    %627 = vmatpush.msra.mxu0 0.0
    %628 = vmatpush.msra.mxu0 0.0
    %629 = vmatpush.msra.mxu0 0.0
    %630 = vmatpush.msra.mxu0 0.0
    %631 = vmatpush.msra.mxu0 0.0
    %632 = vmatpush.msra.mxu0 0.0
    %633 = vmatpush.msra.mxu0 0.0
    %634 = vmatpush.msra.mxu0 0.0
    %635 = vmatpush.msra.mxu0 0.0
    %636 = vmatpush.msra.mxu0 0.0
    %637 = vmatpush.msra.mxu0 %v37
    %638 = vmatpush.msra.mxu0 %v36
    %639 = vmatpush.msra.mxu0 %v35
    %640 = vmatpush.msra.mxu0 %v34
    %641 = vmatpush.msra.mxu0 %v33
    %642 = vmatmul.f32.gmra.mxu0 %v624
    %v643 = vpop.f32.mrf.mxu0
    %v644 = vadd.f32 %v40, %v643
    %645 = vdwg.mxu0
    %v646 = vxor.u32 %v644, 2147483648
    %v647 = vmul.f32 %v646, 1.442695
    %v648 = vpow.pop %v647
    %v649 = vadd.f32 %v648, 1.0
    %v650 = vrcp.pop %v649
    %v651 = vmul.f32 %v649, %v650
    %v652 = vsub.f32 1.0, %v651
    %v653 = vmul.f32 %v650, %v652
    %v654 = vadd.f32 %v650, %v653
    %vm655 = vweird.f32 %v649
    %vm656 = vweird.f32 %v650
    %vm657 = vmor %vm655, %vm656
    %v658 = vsel %vm657, %v650, %v654
    %v659 = vand.u32 2147483647, %v649
    %vm660 = vcmp.eq.f32.partialorder %v659, 8.507059e+37
    %v661 = vand.u32 %v649, 2147483648
    %v662 = vor.u32 1.1754944e-38, %v661
    %v663 = vsel %vm660, %v662, %v658
    %v664 = vmul.f32 1.0, %v663
    %v665 = vtanh.pop %v644
    %v666 = vmul.f32 %v664, %v608
    %668 = vrot.lane.b32.xlu0 %v665, 64
    %v669 = vpop.permute.xlu0 %668
    %v671 = vmul.f32 %v664, %v669
    %673 = vrot.lane.b32.xlu0 %v671, 32
    %v674 = vpop.permute.xlu0 %673
    %v676 = vadd.f32 %v666, %v674
    %v677 = vtanh.pop %v676
    %679 = vrot.lane.b32.xlu0 %v677, 64
    %v680 = vpop.permute.xlu0 %679
    %v682 = vmul.f32 %v664, %v680
    %vm683 = vcmp.gt.s32.totalorder %v42, 7
    %v684 = vsel %vm683, 1, 0
    %685 = vset.pattern.permute.xlu0 0
    %686 = vperm.xlu0 %685, %v684
    %v687 = vpop.permute.xlu0 %686
    %vm688 = vcmp.eq.s32.totalorder %v687, 1
    %v689 = vsel %vm688, %v682, %v607
    %v690 = vsel %vm688, %v682, 0.0
    %692 = vrot.lane.b32.xlu0 %v690, 32
    %v693 = vpop.permute.xlu0 %692
    %695 = vst.msk [vmem:[#allocation2 + $0x7] sm:$0x1] %vm120, %v693
    %696 = vst.msk [vmem:[%s122 + $0x6] sm:$0x2] %vm123, %v693
    %v697 = vld [vmem:[#allocation2] sm:$0xff]
    %v698 = vperm.slane %v689, 0
    %700 = vrot.lane.b32.xlu0 %v43, 96
    %v701 = vpop.permute.xlu0 %700
    %v703 = vmul.f32 %v698, %v701
    %705 = vrot.lane.b32.xlu0 %v703, 32
    %v706 = vpop.permute.xlu0 %705
    %vm707 = vcmask 261120
    %v709 = vsel %vm707, %v697, 0
    %v711 = vsel %vm707, %v706, 0
    %713 = vmatpush.xpose.msra.mxu0 0.0
    %714 = vmatpush.xpose.msra.mxu0 0.0
    %715 = vmatpush.xpose.msra.mxu0 0.0
    %716 = vmatpush.xpose.msra.mxu0 0.0
    %717 = vmatpush.xpose.msra.mxu0 0.0
    %718 = vmatpush.xpose.msra.mxu0 0.0
    %719 = vmatpush.xpose.msra.mxu0 0.0
    %720 = vmatpush.xpose.msra.mxu0 0.0
    %721 = vmatpush.xpose.msra.mxu0 0.0
    %722 = vmatpush.xpose.msra.mxu0 0.0
    %723 = vmatpush.xpose.msra.mxu0 0.0
    %724 = vmatpush.xpose.msra.mxu0 0.0
    %725 = vmatpush.xpose.msra.mxu0 0.0
    %726 = vmatpush.xpose.msra.mxu0 0.0
    %727 = vmatpush.xpose.msra.mxu0 0.0
    %728 = vmatpush.xpose.msra.mxu0 %v711
    %729 = vmatmul.f32.gmra.mxu0 %v709
    %v730 = vpop.f32.mrf.mxu0
    %v731 = vadd.f32 0.0, %v730
    %732 = vdwg.mxu0
    %vm733 = vcmask 15360
    %v734 = vsel %vm733, %v731, -inf
    %v735 = vrot.slane %v734, 4
    %v736 = vmax.f32 %v734, %v735
    %v737 = vrot.slane %v736, 2
    %v738 = vmax.f32 %v736, %v737
    %v739 = vrot.slane %v738, 1
    %v740 = vmax.f32 %v738, %v739
    %v741 = vsub.f32 %v731, %v740
    %v742 = vmul.f32 %v741, 1.442695
    %v743 = vpow.pop %v742
    %v744 = vsel %vm733, %v743, 0.0
    %v745 = vrot.slane %v744, 4
    %v746 = vadd.f32 %v744, %v745
    %v747 = vrot.slane %v746, 2
    %v748 = vadd.f32 %v746, %v747
    %v749 = vrot.slane %v748, 1
    %v750 = vadd.f32 %v748, %v749
    %v751 = vrcp.pop %v750
    %v752 = vmul.f32 %v750, %v751
    %v753 = vsub.f32 1.0, %v752
    %v754 = vmul.f32 %v751, %v753
    %v755 = vadd.f32 %v751, %v754
    %vm756 = vweird.f32 %v750
    %vm757 = vweird.f32 %v751
    %vm758 = vmor %vm756, %vm757
    %v759 = vsel %vm758, %v751, %v755
    %v760 = vand.u32 2147483647, %v750
    %vm761 = vcmp.eq.f32.partialorder %v760, 8.507059e+37
    %v762 = vand.u32 %v750, 2147483648
    %v763 = vor.u32 1.1754944e-38, %v762
    %v764 = vsel %vm761, %v763, %v759
    %v765 = vmul.f32 %v743, %v764
    %766 = vxpose.xlu0.b32.start [1/16] %v765, 128
    %767 = vxpose.xlu0.b32.cont [2/16] 0.0, 128
    %768 = vxpose.xlu0.b32.cont [3/16] 0.0, 128
    %769 = vxpose.xlu0.b32.cont [4/16] 0.0, 128
    %770 = vxpose.xlu0.b32.cont [5/16] 0.0, 128
    %771 = vxpose.xlu0.b32.cont [6/16] 0.0, 128
    %772 = vxpose.xlu0.b32.cont [7/16] 0.0, 128
    %773 = vxpose.xlu0.b32.cont [8/16] 0.0, 128
    %774 = vxpose.xlu0.b32.cont [9/16] 0.0, 128
    %775 = vxpose.xlu0.b32.cont [10/16] 0.0, 128
    %776 = vxpose.xlu0.b32.cont [11/16] 0.0, 128
    %777 = vxpose.xlu0.b32.cont [12/16] 0.0, 128
    %778 = vxpose.xlu0.b32.cont [13/16] 0.0, 128
    %779 = vxpose.xlu0.b32.cont [14/16] 0.0, 128
    %780 = vxpose.xlu0.b32.cont [15/16] 0.0, 128
    %781 = vxpose.xlu0.b32.end [16/16] 0.0, 128
    %v782 = vpop.trf.xlu0
    %v783 = vpop.trf.xlu0
    %v784 = vpop.trf.xlu0
    %v785 = vpop.trf.xlu0
    %v786 = vpop.trf.xlu0
    %v787 = vpop.trf.xlu0
    %v788 = vpop.trf.xlu0
    %v789 = vpop.trf.xlu0
    %v790 = vpop.trf.xlu0
    %v791 = vpop.trf.xlu0
    %v792 = vpop.trf.xlu0
    %v793 = vpop.trf.xlu0
    %v794 = vpop.trf.xlu0
    %v795 = vpop.trf.xlu0
    %v796 = vpop.trf.xlu0
    %v797 = vpop.trf.xlu0
    %v799 = vsel %vm45, %v782, 0
    %801 = vmatpush.msra.mxu0 0.0
    %802 = vmatpush.msra.mxu0 0.0
    %803 = vmatpush.msra.mxu0 0.0
    %804 = vmatpush.msra.mxu0 0.0
    %805 = vmatpush.msra.mxu0 0.0
    %806 = vmatpush.msra.mxu0 0.0
    %807 = vmatpush.msra.mxu0 0.0
    %808 = vmatpush.msra.mxu0 0.0
    %809 = vmatpush.msra.mxu0 0.0
    %810 = vmatpush.msra.mxu0 0.0
    %811 = vmatpush.msra.mxu0 0.0
    %812 = vmatpush.msra.mxu0 0.0
    %813 = vmatpush.msra.mxu0 0.0
    %814 = vmatpush.msra.mxu0 0.0
    %815 = vmatpush.msra.mxu0 0.0
    %816 = vmatpush.msra.mxu0 %v697
    %817 = vmatmul.f32.gmra.mxu0 %v799
    %v818 = vpop.f32.mrf.mxu0
    %v819 = vadd.f32 0.0, %v818
    %820 = vdwg.mxu0
    %v821 = vmul.f32 %v819, %v43
    %vm822 = vcmask 254976
    %v823 = vsel %vm822, %v821, 0.0
    %v824 = vrot.slane %v823, 4
    %v825 = vadd.f32 %v823, %v824
    %v826 = vrot.slane %v825, 2
    %v827 = vadd.f32 %v825, %v826
    %v828 = vrot.slane %v827, 1
    %v829 = vadd.f32 %v827, %v828
    %v830 = vmul.f32 %v829, 0.5
    %832 = vrot.lane.b32.xlu0 %v689, 32
    %v833 = vpop.permute.xlu0 %832
    %836 = vrot.lane.b32.xlu0 %v830, 32
    %v837 = vpop.permute.xlu0 %836
    %v839 = vsel %vm707, %v833, %v837
    %v840 = vld [vmem:[%s122] sm:$0xff]
    %v841 = vperm.slane %v689, 1
    %v842 = vmul.f32 %v841, %v701
    %844 = vrot.lane.b32.xlu0 %v842, 32
    %v845 = vpop.permute.xlu0 %844
    %v847 = vsel %vm707, %v840, 0
    %v849 = vsel %vm707, %v845, 0
    %851 = vmatpush.xpose.msra.mxu0 0.0
    %852 = vmatpush.xpose.msra.mxu0 0.0
    %853 = vmatpush.xpose.msra.mxu0 0.0
    %854 = vmatpush.xpose.msra.mxu0 0.0
    %855 = vmatpush.xpose.msra.mxu0 0.0
    %856 = vmatpush.xpose.msra.mxu0 0.0
    %857 = vmatpush.xpose.msra.mxu0 0.0
    %858 = vmatpush.xpose.msra.mxu0 0.0
    %859 = vmatpush.xpose.msra.mxu0 0.0
    %860 = vmatpush.xpose.msra.mxu0 0.0
    %861 = vmatpush.xpose.msra.mxu0 0.0
    %862 = vmatpush.xpose.msra.mxu0 0.0
    %863 = vmatpush.xpose.msra.mxu0 0.0
    %864 = vmatpush.xpose.msra.mxu0 0.0
    %865 = vmatpush.xpose.msra.mxu0 0.0
    %866 = vmatpush.xpose.msra.mxu0 %v849
    %867 = vmatmul.f32.gmra.mxu0 %v847
    %v868 = vpop.f32.mrf.mxu0
    %v869 = vadd.f32 0.0, %v868
    %870 = vdwg.mxu0
    %v871 = vsel %vm733, %v869, -inf
    %v872 = vrot.slane %v871, 4
    %v873 = vmax.f32 %v871, %v872
    %v874 = vrot.slane %v873, 2
    %v875 = vmax.f32 %v873, %v874
    %v876 = vrot.slane %v875, 1
    %v877 = vmax.f32 %v875, %v876
    %v878 = vsub.f32 %v869, %v877
    %v879 = vmul.f32 %v878, 1.442695
    %v880 = vpow.pop %v879
    %v881 = vsel %vm733, %v880, 0.0
    %v882 = vrot.slane %v881, 4
    %v883 = vadd.f32 %v881, %v882
    %v884 = vrot.slane %v883, 2
    %v885 = vadd.f32 %v883, %v884
    %v886 = vrot.slane %v885, 1
    %v887 = vadd.f32 %v885, %v886
    %v888 = vrcp.pop %v887
    %v889 = vmul.f32 %v887, %v888
    %v890 = vsub.f32 1.0, %v889
    %v891 = vmul.f32 %v888, %v890
    %v892 = vadd.f32 %v888, %v891
    %vm893 = vweird.f32 %v887
    %vm894 = vweird.f32 %v888
    %vm895 = vmor %vm893, %vm894
    %v896 = vsel %vm895, %v888, %v892
    %v897 = vand.u32 2147483647, %v887
    %vm898 = vcmp.eq.f32.partialorder %v897, 8.507059e+37
    %v899 = vand.u32 %v887, 2147483648
    %v900 = vor.u32 1.1754944e-38, %v899
    %v901 = vsel %vm898, %v900, %v896
    %v902 = vmul.f32 %v880, %v901
    %903 = vxpose.xlu0.b32.start [1/16] %v902, 128
    %904 = vxpose.xlu0.b32.cont [2/16] 0.0, 128
    %905 = vxpose.xlu0.b32.cont [3/16] 0.0, 128
    %906 = vxpose.xlu0.b32.cont [4/16] 0.0, 128
    %907 = vxpose.xlu0.b32.cont [5/16] 0.0, 128
    %908 = vxpose.xlu0.b32.cont [6/16] 0.0, 128
    %909 = vxpose.xlu0.b32.cont [7/16] 0.0, 128
    %910 = vxpose.xlu0.b32.cont [8/16] 0.0, 128
    %911 = vxpose.xlu0.b32.cont [9/16] 0.0, 128
    %912 = vxpose.xlu0.b32.cont [10/16] 0.0, 128
    %913 = vxpose.xlu0.b32.cont [11/16] 0.0, 128
    %914 = vxpose.xlu0.b32.cont [12/16] 0.0, 128
    %915 = vxpose.xlu0.b32.cont [13/16] 0.0, 128
    %916 = vxpose.xlu0.b32.cont [14/16] 0.0, 128
    %917 = vxpose.xlu0.b32.cont [15/16] 0.0, 128
    %918 = vxpose.xlu0.b32.end [16/16] 0.0, 128
    %v919 = vpop.trf.xlu0
    %v920 = vpop.trf.xlu0
    %v921 = vpop.trf.xlu0
    %v922 = vpop.trf.xlu0
    %v923 = vpop.trf.xlu0
    %v924 = vpop.trf.xlu0
    %v925 = vpop.trf.xlu0
    %v926 = vpop.trf.xlu0
    %v927 = vpop.trf.xlu0
    %v928 = vpop.trf.xlu0
    %v929 = vpop.trf.xlu0
    %v930 = vpop.trf.xlu0
    %v931 = vpop.trf.xlu0
    %v932 = vpop.trf.xlu0
    %v933 = vpop.trf.xlu0
    %v934 = vpop.trf.xlu0
    %v936 = vsel %vm45, %v919, 0
    %938 = vmatpush.msra.mxu0 0.0
    %939 = vmatpush.msra.mxu0 0.0
    %940 = vmatpush.msra.mxu0 0.0
    %941 = vmatpush.msra.mxu0 0.0
    %942 = vmatpush.msra.mxu0 0.0
    %943 = vmatpush.msra.mxu0 0.0
    %944 = vmatpush.msra.mxu0 0.0
    %945 = vmatpush.msra.mxu0 0.0
    %946 = vmatpush.msra.mxu0 0.0
    %947 = vmatpush.msra.mxu0 0.0
    %948 = vmatpush.msra.mxu0 0.0
    %949 = vmatpush.msra.mxu0 0.0
    %950 = vmatpush.msra.mxu0 0.0
    %951 = vmatpush.msra.mxu0 0.0
    %952 = vmatpush.msra.mxu0 0.0
    %953 = vmatpush.msra.mxu0 %v840
    %954 = vmatmul.f32.gmra.mxu0 %v936
    %v955 = vpop.f32.mrf.mxu0
    %v956 = vadd.f32 0.0, %v955
    %957 = vdwg.mxu0
    %v958 = vmul.f32 %v956, %v43
    %v959 = vsel %vm822, %v958, 0.0
    %v960 = vrot.slane %v959, 4
    %v961 = vadd.f32 %v959, %v960
    %v962 = vrot.slane %v961, 2
    %v963 = vadd.f32 %v961, %v962
    %v964 = vrot.slane %v963, 1
    %v965 = vadd.f32 %v963, %v964
    %v966 = vmul.f32 %v965, 0.5
    %968 = vrot.lane.b32.xlu0 %v966, 32
    %v969 = vpop.permute.xlu0 %968
    %v971 = vsel %vm707, %v833, %v969
    %vm972 = vcmask 1040384
    %v973 = vsel %vm972, %v839, %v971
    %v974 = vld [vmem:[%s5] sm:$0xff]
    %v975 = vld [vmem:[%s5 + $0x8] sm:$0xff]
    %v976 = vld [vmem:[%s5 + $0x10] sm:$0xff]
    %v977 = vld [vmem:[%s5 + $0x18] sm:$0xff]
    %v978 = vld [vmem:[%s5 + $0x20] sm:$0xff]
    %v979 = vld [vmem:[%s5 + $0x28] sm:$0xff]
    %v980 = vld [vmem:[%s5 + $0x30] sm:$0xff]
    %v981 = vld [vmem:[%s5 + $0x38] sm:$0xff]
    %v982 = vld [vmem:[%s6] sm:$0x1]
    %v984 = vperm.slane %v982, 0
    %vm986 = vcmask 523264
    %v988 = vsel %vm986, %v973, 0
    %990 = vmatpush.msra.mxu0 0.0
    %991 = vmatpush.msra.mxu0 0.0
    %992 = vmatpush.msra.mxu0 0.0
    %993 = vmatpush.msra.mxu0 0.0
    %994 = vmatpush.msra.mxu0 0.0
    %995 = vmatpush.msra.mxu0 0.0
    %996 = vmatpush.msra.mxu0 0.0
    %997 = vmatpush.msra.mxu0 0.0
    %998 = vmatpush.msra.mxu0 %v981
    %999 = vmatpush.msra.mxu0 %v980
    %1000 = vmatpush.msra.mxu0 %v979
    %1001 = vmatpush.msra.mxu0 %v978
    %1002 = vmatpush.msra.mxu0 %v977
    %1003 = vmatpush.msra.mxu0 %v976
    %1004 = vmatpush.msra.mxu0 %v975
    %1005 = vmatpush.msra.mxu0 %v974
    %1006 = vmatmul.f32.gmra.mxu0 %v988
    %v1007 = vpop.f32.mrf.mxu0
    %v1008 = vadd.f32 %v984, %v1007
    %1009 = vdwg.mxu0
    %v1010 = vld [vmem:[%s7] sm:$0xff]
    %v1011 = vld [vmem:[%s7 + $0x8] sm:$0xff]
    %v1012 = vld [vmem:[%s7 + $0x10] sm:$0xff]
    %v1013 = vld [vmem:[%s7 + $0x18] sm:$0xff]
    %v1014 = vld [vmem:[%s8] sm:$0x1]
    %v1016 = vperm.slane %v1014, 0
    %v1019 = vsel %vm707, %v1008, 0
    %1021 = vmatpush.msra.mxu0 0.0
    %1022 = vmatpush.msra.mxu0 0.0
    %1023 = vmatpush.msra.mxu0 0.0
    %1024 = vmatpush.msra.mxu0 0.0
    %1025 = vmatpush.msra.mxu0 0.0
    %1026 = vmatpush.msra.mxu0 0.0
    %1027 = vmatpush.msra.mxu0 0.0
    %1028 = vmatpush.msra.mxu0 0.0
    %1029 = vmatpush.msra.mxu0 0.0
    %1030 = vmatpush.msra.mxu0 0.0
    %1031 = vmatpush.msra.mxu0 0.0
    %1032 = vmatpush.msra.mxu0 0.0
    %1033 = vmatpush.msra.mxu0 %v1013
    %1034 = vmatpush.msra.mxu0 %v1012
    %1035 = vmatpush.msra.mxu0 %v1011
    %1036 = vmatpush.msra.mxu0 %v1010
    %1037 = vmatmul.f32.gmra.mxu0 %v1019
    %v1038 = vpop.f32.mrf.mxu0
    %v1039 = vadd.f32 %v1016, %v1038
    %1040 = vdwg.mxu0
    %vm1041 = vcmask 9216
    %1042 = vst.msk [vmem:[#allocation3] sm:$0x3] %vm1041, %v1039
    // Predicated region
    $region38: #{tpu_custom_call.1} parent=1 // pred_check
      _
    $region39: #{tpu_custom_call.1} parent=1 // pred_check_branch
      %1044 = sbr.rel (0) target = $region41
    $region40: #{tpu_custom_call.1} parent=1 // pred_region
      %1046 = vsyncadd [#allocation4], 0
      %s1048 = sshll.u32 [#allocation3], 4
      %s1049 = int_to_ptr.vmem [resolvable:$true] %s1048
      %s1050 = sshll.u32 %s9, 4
      %s1051 = int_to_ptr.hbm [resolvable:$true] %s1050
      %1053 = dma.vmem_to_hbm [thread:$0]  %s1049, 32, %s1051, [#allocation4]
    $region41: #{tpu_custom_call.1} parent=1 // pred_fallthru
      _
    // Predicated region
    $region42: #{tpu_custom_call.1} parent=1 // pred_check
      _
    $region43: #{tpu_custom_call.1} parent=1 // pred_check_branch
      %1055 = sbr.rel (0) target = $region45
    $region44: #{tpu_custom_call.1} parent=1 // pred_region
      %1057 = dma.done [#allocation4], 32
    $region45: #{tpu_custom_call.1} parent=1 // pred_fallthru
      _
    %1058 = vsyncpa [#allocation4], 1

</llo_original>
